<compile_context>
chip_gen: v6e
topology: v6e:2x2x1
jax: 0.10.0
libtpu: 0.0.40
codegen_flags: <defaults>
</compile_context>

<pallas_src>
import functools

import jax
import jax.numpy as jnp
import numpy as np
from jax.experimental import pallas as pl
from jax.experimental.pallas import tpu as pltpu


def _patch_expand_kernel(x_ref, w_ref, g_ref, b_ref, o_ref, *, eps):
    # x_ref : (TH, W, D)        input row-tile (TH rows of (b, h), W tokens each)
    # w_ref : (4, D, D)         quadrant weights, w_ref[q][k, c] = W_e[q*D + c, k]
    # g_ref : (1, D)            LayerNorm gamma
    # b_ref : (1, D)            LayerNorm beta
    # o_ref : (TH, 2, W, 2*D)   output tile, laid out as (row, p1, w, p2*D + c)
    th, w, d = x_ref.shape
    x = x_ref[...].reshape(th * w, d)
    gamma = g_ref[...].astype(jnp.float32)
    beta = b_ref[...].astype(jnp.float32)

    for p1 in range(2):                       # static, unrolled
        halves = []
        for p2 in range(2):
            q = 2 * p1 + p2
            # (TH*W, D) @ (D, D) on the MXU, f32 accumulation.
            y = jnp.dot(x, w_ref[q], preferred_element_type=jnp.float32)
            mu = jnp.mean(y, axis=-1, keepdims=True)
            yc = y - mu
            var = jnp.mean(yc * yc, axis=-1, keepdims=True)
            yn = yc * jax.lax.rsqrt(var + eps)
            halves.append(yn * gamma + beta)
        blk = jnp.concatenate(halves, axis=-1)            # (TH*W, 2*D), lane-dense
        o_ref[:, p1, :, :] = blk.reshape(th, w, 2 * d).astype(o_ref.dtype)


def _pick_tile_rows(m_rows, w, d, target_bytes=1 << 20):
    """Largest divisor of m_rows whose f32 input block stays <= ~target_bytes
    (keeps 2x in + 2x out buffers comfortably inside scoped VMEM on all gens)."""
    rows = max(1, target_bytes // max(1, w * d * 4))
    th = int(min(m_rows, rows))
    while m_rows % th != 0:
        th -= 1
    return th


def up_forward(x, expand_weight, gamma, beta, H, W, *, eps=1e-5):
    """x: (B, H*W, D); expand_weight: (4*D, D) (PyTorch Linear layout, no bias);
    gamma/beta: (D,). Returns (B, 4*H*W, D) — identical to Up(size, dim)(x)."""
    B, L, D = x.shape
    assert L == H * W, "input feature has wrong size"
    assert expand_weight.shape == (4 * D, D)

    M = B * H                                   # one "row group" per (b, h)
    x3 = x.reshape(M, W, D)                     # free, contiguous
    # (4D, D) -> (4, D, D) so the kernel computes x @ w4[q] for quadrant q = 2*p1 + p2.
    # (Only the tiny weight is transposed in the wrapper; activations are untouched.)
    w4 = jnp.transpose(expand_weight.reshape(4, D, D), (0, 2, 1))
    g2 = gamma.reshape(1, D)
    b2 = beta.reshape(1, D)

    # TODO(synk): for very small D (e.g. D < 128, as in this test) the lane axis is
    # under-utilized; padding D to 128 would need masked LayerNorm statistics, so we
    # accept the masked stores for toy shapes (real configs have D a multiple of 128).
    TH = _pick_tile_rows(M, W, D)
    grid = (M // TH,)

    tokens = B * H * W
    cost = pl.CostEstimate(
        flops=2 * tokens * D * 4 * D,
        transcendentals=4 * tokens,             # one rsqrt per output token
        bytes_accessed=4 * (tokens * D + 4 * D * D + 2 * D + 4 * tokens * D),
    )

    out = pl.pallas_call(
        functools.partial(_patch_expand_kernel, eps=eps),
        out_shape=jax.ShapeDtypeStruct((M, 2, W, 2 * D), x.dtype),
        grid_spec=pl.GridSpec(
            grid=grid,
            in_specs=[
                pl.BlockSpec((TH, W, D), lambda i: (i, 0, 0)),    # streamed row tiles
                pl.BlockSpec((4, D, D), lambda i: (0, 0, 0)),     # resident weight
                pl.BlockSpec((1, D), lambda i: (0, 0)),           # gamma
                pl.BlockSpec((1, D), lambda i: (0, 0)),           # beta
            ],
            out_specs=pl.BlockSpec((TH, 2, W, 2 * D), lambda i: (i, 0, 0, 0)),
        ),
        compiler_params=pltpu.CompilerParams(
            dimension_semantics=("parallel",),      # independent tiles -> megacore
            vmem_limit_bytes=64 * 1024 * 1024,
        ),
        cost_estimate=cost,
    )(x3, w4, g2, b2)

    # (M, 2, W, 2D) already flattens in (2h+p1, 2w+p2, c) order -> free reshape.
    return out.reshape(B, 4 * H * W, D)


def reference_up(x, expand_weight, gamma, beta, H, W, *, eps=1e-5):
    """Pure-JAX reference matching PatchExpand.forward (Linear + rearrange + LN)."""
    B, L, D = x.shape
    y = jnp.einsum("blk,ck->blc", x, expand_weight,
                   precision=jax.lax.Precision.HIGHEST)          # (B, L, 4D)
    y = y.reshape(B, H, W, 2, 2, D)                              # (p1, p2, c)
    y = jnp.transpose(y, (0, 1, 3, 2, 4, 5)).reshape(B, 4 * H * W, D)
    mu = y.mean(-1, keepdims=True)
    var = ((y - mu) ** 2).mean(-1, keepdims=True)
    return (y - mu) / jnp.sqrt(var + eps) * gamma + beta


if __name__ == "__main__":
    # Up(size=8, dim=32): x is (B, size*size, dim)
    B, size, dim = 2, 8, 32
    H = W = size

    key = jax.random.PRNGKey(0)
    kx, kw, kg, kb = jax.random.split(key, 4)

    x = jax.random.normal(kx, (B, H * W, dim), dtype=jnp.float32)

    bound = 1.0 / np.sqrt(dim)
    expand_weight = jax.random.uniform(
        kw, (4 * dim, dim), minval=-bound, maxval=bound, dtype=jnp.float32)
    gamma = 1.0 + 0.1 * jax.random.normal(kg, (dim,), dtype=jnp.float32)
    beta = 0.1 * jax.random.normal(kb, (dim,), dtype=jnp.float32)

    out = jax.block_until_ready(up_forward(x, expand_weight, gamma, beta, H, W))
    ref = jax.block_until_ready(reference_up(x, expand_weight, gamma, beta, H, W))

    assert out.shape == (B, 4 * H * W, dim), out.shape
    np.testing.assert_allclose(np.asarray(out), np.asarray(ref),
                               atol=1e-4, rtol=1e-4)

    print("KERNEL_OK")
</pallas_src>

<mosaic_0001>
module attributes {stable_mosaic.version = 11 : i64} {
  func.func @_patch_expand_kernel(%arg0: i32, %arg1: memref<16x8x32xf32, #tpu.memory_space<vmem>>, %arg2: memref<4x32x32xf32, #tpu.memory_space<vmem>>, %arg3: memref<1x32xf32, #tpu.memory_space<vmem>>, %arg4: memref<1x32xf32, #tpu.memory_space<vmem>>, %arg5: memref<16x2x8x64xf32, #tpu.memory_space<vmem>>) attributes {dimension_semantics = [#tpu.dimension_semantics<parallel>], iteration_bounds = array<i64: 1>, scalar_prefetch = 0 : i64, scratch_operands = 0 : i64, tpu.core_type = #tpu.core_type<tc>, window_params = [{transform_indices = @transform_0, window_bounds = array<i64: 16, 8, 32>}, {pipeline_mode = #tpu.pipeline_mode<synchronous>, transform_indices = @transform_1, window_bounds = array<i64: 4, 32, 32>}, {pipeline_mode = #tpu.pipeline_mode<synchronous>, transform_indices = @transform_2, window_bounds = array<i64: 1, 32>}, {pipeline_mode = #tpu.pipeline_mode<synchronous>, transform_indices = @transform_3, window_bounds = array<i64: 1, 32>}, {transform_indices = @transform_4, window_bounds = array<i64: 16, 2, 8, 64>}]} {
    %c0 = arith.constant 0 : index
    %c0_0 = arith.constant 0 : index
    %c0_1 = arith.constant 0 : index
    %0 = vector.load %arg1[%c0, %c0_0, %c0_1] : memref<16x8x32xf32, #tpu.memory_space<vmem>>, vector<16x8x32xf32>
    %1 = vector.shape_cast %0 : vector<16x8x32xf32> to vector<128x32xf32>
    %c0_2 = arith.constant 0 : index
    %c0_3 = arith.constant 0 : index
    %2 = vector.load %arg3[%c0_2, %c0_3] : memref<1x32xf32, #tpu.memory_space<vmem>>, vector<1x32xf32>
    %c0_4 = arith.constant 0 : index
    %c0_5 = arith.constant 0 : index
    %3 = vector.load %arg4[%c0_4, %c0_5] : memref<1x32xf32, #tpu.memory_space<vmem>>, vector<1x32xf32>
    %c0_6 = arith.constant 0 : index
    %c0_7 = arith.constant 0 : index
    %c0_8 = arith.constant 0 : index
    %4 = vector.load %arg2[%c0_6, %c0_7, %c0_8] : memref<4x32x32xf32, #tpu.memory_space<vmem>>, vector<1x32x32xf32>
    %5 = vector.shape_cast %4 : vector<1x32x32xf32> to vector<32x32xf32>
    %cst = arith.constant dense<0.000000e+00> : vector<128x32xf32>
    %6 = tpu.matmul %1, %5, %cst {dimension_numbers = #tpu.dot_dimension_numbers<[1], [0], [0], [1], [0, 0, 1, 1], [], []>} : vector<128x32xf32>, vector<32x32xf32>, vector<128x32xf32> -> vector<128x32xf32>
    %cst_9 = arith.constant dense<0.000000e+00> : vector<128xf32>
    %7 = vector.multi_reduction <add>, %6, %cst_9 [1] : vector<128x32xf32> to vector<128xf32>
    %8 = vector.shape_cast %7 : vector<128xf32> to vector<128x1xf32>
    %cst_10 = arith.constant 3.200000e+01 : f32
    %9 = vector.broadcast %cst_10 : f32 to vector<128x1xf32>
    %10 = arith.divf %8, %9 : vector<128x1xf32>
    %11 = vector.broadcast %10 : vector<128x1xf32> to vector<128x32xf32>
    %12 = arith.subf %6, %11 : vector<128x32xf32>
    %13 = arith.mulf %12, %12 : vector<128x32xf32>
    %cst_11 = arith.constant dense<0.000000e+00> : vector<128xf32>
    %14 = vector.multi_reduction <add>, %13, %cst_11 [1] : vector<128x32xf32> to vector<128xf32>
    %15 = vector.shape_cast %14 : vector<128xf32> to vector<128x1xf32>
    %cst_12 = arith.constant 3.200000e+01 : f32
    %16 = vector.broadcast %cst_12 : f32 to vector<128x1xf32>
    %17 = arith.divf %15, %16 : vector<128x1xf32>
    %cst_13 = arith.constant 9.99999974E-6 : f32
    %18 = vector.broadcast %cst_13 : f32 to vector<128x1xf32>
    %19 = arith.addf %17, %18 : vector<128x1xf32>
    %20 = math.rsqrt %19 : vector<128x1xf32>
    %21 = vector.broadcast %20 : vector<128x1xf32> to vector<128x32xf32>
    %22 = arith.mulf %12, %21 : vector<128x32xf32>
    %23 = vector.broadcast %2 : vector<1x32xf32> to vector<128x32xf32>
    %24 = arith.mulf %22, %23 : vector<128x32xf32>
    %25 = vector.broadcast %3 : vector<1x32xf32> to vector<128x32xf32>
    %26 = arith.addf %24, %25 : vector<128x32xf32>
    %c1 = arith.constant 1 : index
    %c0_14 = arith.constant 0 : index
    %c0_15 = arith.constant 0 : index
    %27 = vector.load %arg2[%c1, %c0_14, %c0_15] : memref<4x32x32xf32, #tpu.memory_space<vmem>>, vector<1x32x32xf32>
    %28 = vector.shape_cast %27 : vector<1x32x32xf32> to vector<32x32xf32>
    %cst_16 = arith.constant dense<0.000000e+00> : vector<128x32xf32>
    %29 = tpu.matmul %1, %28, %cst_16 {dimension_numbers = #tpu.dot_dimension_numbers<[1], [0], [0], [1], [0, 0, 1, 1], [], []>} : vector<128x32xf32>, vector<32x32xf32>, vector<128x32xf32> -> vector<128x32xf32>
    %cst_17 = arith.constant dense<0.000000e+00> : vector<128xf32>
    %30 = vector.multi_reduction <add>, %29, %cst_17 [1] : vector<128x32xf32> to vector<128xf32>
    %31 = vector.shape_cast %30 : vector<128xf32> to vector<128x1xf32>
    %cst_18 = arith.constant 3.200000e+01 : f32
    %32 = vector.broadcast %cst_18 : f32 to vector<128x1xf32>
    %33 = arith.divf %31, %32 : vector<128x1xf32>
    %34 = vector.broadcast %33 : vector<128x1xf32> to vector<128x32xf32>
    %35 = arith.subf %29, %34 : vector<128x32xf32>
    %36 = arith.mulf %35, %35 : vector<128x32xf32>
    %cst_19 = arith.constant dense<0.000000e+00> : vector<128xf32>
    %37 = vector.multi_reduction <add>, %36, %cst_19 [1] : vector<128x32xf32> to vector<128xf32>
    %38 = vector.shape_cast %37 : vector<128xf32> to vector<128x1xf32>
    %cst_20 = arith.constant 3.200000e+01 : f32
    %39 = vector.broadcast %cst_20 : f32 to vector<128x1xf32>
    %40 = arith.divf %38, %39 : vector<128x1xf32>
    %cst_21 = arith.constant 9.99999974E-6 : f32
    %41 = vector.broadcast %cst_21 : f32 to vector<128x1xf32>
    %42 = arith.addf %40, %41 : vector<128x1xf32>
    %43 = math.rsqrt %42 : vector<128x1xf32>
    %44 = vector.broadcast %43 : vector<128x1xf32> to vector<128x32xf32>
    %45 = arith.mulf %35, %44 : vector<128x32xf32>
    %46 = vector.broadcast %2 : vector<1x32xf32> to vector<128x32xf32>
    %47 = arith.mulf %45, %46 : vector<128x32xf32>
    %48 = vector.broadcast %3 : vector<1x32xf32> to vector<128x32xf32>
    %49 = arith.addf %47, %48 : vector<128x32xf32>
    %50 = tpu.concatenate %26, %49 in 1 : vector<128x32xf32>, vector<128x32xf32> -> vector<128x64xf32>
    %51 = vector.shape_cast %50 : vector<128x64xf32> to vector<16x8x64xf32>
    %c0_22 = arith.constant 0 : index
    %c0_23 = arith.constant 0 : index
    %c0_24 = arith.constant 0 : index
    %c0_25 = arith.constant 0 : index
    %52 = vector.load %arg5[%c0_22, %c0_23, %c0_24, %c0_25] : memref<16x2x8x64xf32, #tpu.memory_space<vmem>>, vector<16x1x8x64xf32>
    %53 = vector.shape_cast %52 : vector<16x1x8x64xf32> to vector<16x8x64xf32>
    %54 = vector.shape_cast %51 : vector<16x8x64xf32> to vector<16x1x8x64xf32>
    tpu.vector_store %arg5[%c0_22, %c0_23, %c0_24, %c0_25], %54 {strides = array<i32>} : memref<16x2x8x64xf32, #tpu.memory_space<vmem>>, vector<16x1x8x64xf32>,
    %c2 = arith.constant 2 : index
    %c0_26 = arith.constant 0 : index
    %c0_27 = arith.constant 0 : index
    %55 = vector.load %arg2[%c2, %c0_26, %c0_27] : memref<4x32x32xf32, #tpu.memory_space<vmem>>, vector<1x32x32xf32>
    %56 = vector.shape_cast %55 : vector<1x32x32xf32> to vector<32x32xf32>
    %cst_28 = arith.constant dense<0.000000e+00> : vector<128x32xf32>
    %57 = tpu.matmul %1, %56, %cst_28 {dimension_numbers = #tpu.dot_dimension_numbers<[1], [0], [0], [1], [0, 0, 1, 1], [], []>} : vector<128x32xf32>, vector<32x32xf32>, vector<128x32xf32> -> vector<128x32xf32>
    %cst_29 = arith.constant dense<0.000000e+00> : vector<128xf32>
    %58 = vector.multi_reduction <add>, %57, %cst_29 [1] : vector<128x32xf32> to vector<128xf32>
    %59 = vector.shape_cast %58 : vector<128xf32> to vector<128x1xf32>
    %cst_30 = arith.constant 3.200000e+01 : f32
    %60 = vector.broadcast %cst_30 : f32 to vector<128x1xf32>
    %61 = arith.divf %59, %60 : vector<128x1xf32>
    %62 = vector.broadcast %61 : vector<128x1xf32> to vector<128x32xf32>
    %63 = arith.subf %57, %62 : vector<128x32xf32>
    %64 = arith.mulf %63, %63 : vector<128x32xf32>
    %cst_31 = arith.constant dense<0.000000e+00> : vector<128xf32>
    %65 = vector.multi_reduction <add>, %64, %cst_31 [1] : vector<128x32xf32> to vector<128xf32>
    %66 = vector.shape_cast %65 : vector<128xf32> to vector<128x1xf32>
    %cst_32 = arith.constant 3.200000e+01 : f32
    %67 = vector.broadcast %cst_32 : f32 to vector<128x1xf32>
    %68 = arith.divf %66, %67 : vector<128x1xf32>
    %cst_33 = arith.constant 9.99999974E-6 : f32
    %69 = vector.broadcast %cst_33 : f32 to vector<128x1xf32>
    %70 = arith.addf %68, %69 : vector<128x1xf32>
    %71 = math.rsqrt %70 : vector<128x1xf32>
    %72 = vector.broadcast %71 : vector<128x1xf32> to vector<128x32xf32>
    %73 = arith.mulf %63, %72 : vector<128x32xf32>
    %74 = vector.broadcast %2 : vector<1x32xf32> to vector<128x32xf32>
    %75 = arith.mulf %73, %74 : vector<128x32xf32>
    %76 = vector.broadcast %3 : vector<1x32xf32> to vector<128x32xf32>
    %77 = arith.addf %75, %76 : vector<128x32xf32>
    %c3 = arith.constant 3 : index
    %c0_34 = arith.constant 0 : index
    %c0_35 = arith.constant 0 : index
    %78 = vector.load %arg2[%c3, %c0_34, %c0_35] : memref<4x32x32xf32, #tpu.memory_space<vmem>>, vector<1x32x32xf32>
    %79 = vector.shape_cast %78 : vector<1x32x32xf32> to vector<32x32xf32>
    %cst_36 = arith.constant dense<0.000000e+00> : vector<128x32xf32>
    %80 = tpu.matmul %1, %79, %cst_36 {dimension_numbers = #tpu.dot_dimension_numbers<[1], [0], [0], [1], [0, 0, 1, 1], [], []>} : vector<128x32xf32>, vector<32x32xf32>, vector<128x32xf32> -> vector<128x32xf32>
    %cst_37 = arith.constant dense<0.000000e+00> : vector<128xf32>
    %81 = vector.multi_reduction <add>, %80, %cst_37 [1] : vector<128x32xf32> to vector<128xf32>
    %82 = vector.shape_cast %81 : vector<128xf32> to vector<128x1xf32>
    %cst_38 = arith.constant 3.200000e+01 : f32
    %83 = vector.broadcast %cst_38 : f32 to vector<128x1xf32>
    %84 = arith.divf %82, %83 : vector<128x1xf32>
    %85 = vector.broadcast %84 : vector<128x1xf32> to vector<128x32xf32>
    %86 = arith.subf %80, %85 : vector<128x32xf32>
    %87 = arith.mulf %86, %86 : vector<128x32xf32>
    %cst_39 = arith.constant dense<0.000000e+00> : vector<128xf32>
    %88 = vector.multi_reduction <add>, %87, %cst_39 [1] : vector<128x32xf32> to vector<128xf32>
    %89 = vector.shape_cast %88 : vector<128xf32> to vector<128x1xf32>
    %cst_40 = arith.constant 3.200000e+01 : f32
    %90 = vector.broadcast %cst_40 : f32 to vector<128x1xf32>
    %91 = arith.divf %89, %90 : vector<128x1xf32>
    %cst_41 = arith.constant 9.99999974E-6 : f32
    %92 = vector.broadcast %cst_41 : f32 to vector<128x1xf32>
    %93 = arith.addf %91, %92 : vector<128x1xf32>
    %94 = math.rsqrt %93 : vector<128x1xf32>
    %95 = vector.broadcast %94 : vector<128x1xf32> to vector<128x32xf32>
    %96 = arith.mulf %86, %95 : vector<128x32xf32>
    %97 = vector.broadcast %2 : vector<1x32xf32> to vector<128x32xf32>
    %98 = arith.mulf %96, %97 : vector<128x32xf32>
    %99 = vector.broadcast %3 : vector<1x32xf32> to vector<128x32xf32>
    %100 = arith.addf %98, %99 : vector<128x32xf32>
    %101 = tpu.concatenate %77, %100 in 1 : vector<128x32xf32>, vector<128x32xf32> -> vector<128x64xf32>
    %102 = vector.shape_cast %101 : vector<128x64xf32> to vector<16x8x64xf32>
    %c0_42 = arith.constant 0 : index
    %c1_43 = arith.constant 1 : index
    %c0_44 = arith.constant 0 : index
    %c0_45 = arith.constant 0 : index
    %103 = vector.load %arg5[%c0_42, %c1_43, %c0_44, %c0_45] : memref<16x2x8x64xf32, #tpu.memory_space<vmem>>, vector<16x1x8x64xf32>
    %104 = vector.shape_cast %103 : vector<16x1x8x64xf32> to vector<16x8x64xf32>
    %105 = vector.shape_cast %102 : vector<16x8x64xf32> to vector<16x1x8x64xf32>
    tpu.vector_store %arg5[%c0_42, %c1_43, %c0_44, %c0_45], %105 {strides = array<i32>} : memref<16x2x8x64xf32, #tpu.memory_space<vmem>>, vector<16x1x8x64xf32>,
    return
  }
  func.func @transform_0(%arg0: i32) -> (i32, i32, i32) {
    %c0_i32 = arith.constant 0 : i32
    %c0_i32_0 = arith.constant 0 : i32
    %c0_i32_1 = arith.constant 0 : i32
    return %arg0, %c0_i32, %c0_i32_0 : i32, i32, i32
  }
  func.func @transform_1(%arg0: i32) -> (i32, i32, i32) {
    %c0_i32 = arith.constant 0 : i32
    %c0_i32_0 = arith.constant 0 : i32
    %c0_i32_1 = arith.constant 0 : i32
    %c0_i32_2 = arith.constant 0 : i32
    return %c0_i32, %c0_i32_0, %c0_i32_1 : i32, i32, i32
  }
  func.func @transform_2(%arg0: i32) -> (i32, i32) {
    %c0_i32 = arith.constant 0 : i32
    %c0_i32_0 = arith.constant 0 : i32
    %c0_i32_1 = arith.constant 0 : i32
    return %c0_i32, %c0_i32_0 : i32, i32
  }
  func.func @transform_3(%arg0: i32) -> (i32, i32) {
    %c0_i32 = arith.constant 0 : i32
    %c0_i32_0 = arith.constant 0 : i32
    %c0_i32_1 = arith.constant 0 : i32
    return %c0_i32, %c0_i32_0 : i32, i32
  }
  func.func @transform_4(%arg0: i32) -> (i32, i32, i32, i32) {
    %c0_i32 = arith.constant 0 : i32
    %c0_i32_0 = arith.constant 0 : i32
    %c0_i32_1 = arith.constant 0 : i32
    %c0_i32_2 = arith.constant 0 : i32
    return %arg0, %c0_i32, %c0_i32_0, %c0_i32_1 : i32, i32, i32, i32
  }
}

</mosaic_0001>

<llo_original>
// kernel: tpu_custom_call.1
$region0: #{tpu_custom_call.1}
  #allocation0 [shape = 'u32[]', space=smem, size = 0x4, offset = 0x4, fixed_abs, tag = 'smem constant byte address 0x4 - core index']
  #allocation1 [shape = 'u32[144,128]{1,0:T(1,128)}', space=vmem, size = 0x12000, scoped, tag = 'internal scratch']
  %s0 = inlined_call_operand.hbm [shape: f32[16,8,32], index: 0, kind: input, shape index: {}]
  %s1 = inlined_call_operand.hbm [shape: f32[4,32,32], index: 1, kind: input, shape index: {}]
  %s2 = inlined_call_operand.vmem [shape: f32[1,32], index: 2, kind: input, shape index: {}]
  %s3 = inlined_call_operand.vmem [shape: f32[1,32], index: 3, kind: input, shape index: {}]
  %s4 = inlined_call_operand.hbm [shape: f32[16,2,8,64], index: 4, kind: output, shape index: {}]
  %s5 = sld [smem:[#allocation0]]
  $region34: #{tpu_custom_call.1} parent=0
    _
  %s7 = ssub.s32 1, %s5
  %s8 = scalar_select 0, %s7, %s5
  $region1: #{tpu_custom_call.1} parent=0
    #allocation2 [shape = 'u8[65536]{0}', space=vmem, size = 0x10000, scoped, tag = 'input window, operand 0, single buffered']
    #allocation3 [shape = 's32[1]{0}', space=sflag, size = 0x4, scoped, tag = 'scoped memory for tpu_custom_call.1']
    #allocation4 [shape = 's32[1]{0}', space=sflag, size = 0x4, scoped, tag = 'scoped memory for tpu_custom_call.1']
    #allocation5 [shape = 'u8[65536]{0}', space=vmem, size = 0x10000, scoped, tag = 'input window, operand 1, single buffered']
    #allocation6 [shape = 's32[1]{0}', space=sflag, size = 0x4, scoped, tag = 'scoped memory for tpu_custom_call.1']
    #allocation7 [shape = 'u8[131072]{0}', space=vmem, size = 0x20000, scoped, tag = 'output window, operand 0, single buffered']
    %9 = vsyncpa [#allocation3], 0
    %10 = vsyncpa [#allocation6], 0
    %11 = vsyncpa [#allocation4], 0
    // Predicated region
    $region2: #{tpu_custom_call.1} parent=1 // pred_check
      _
    $region3: #{tpu_custom_call.1} parent=1 // pred_check_branch
      %13 = sbr.rel (0) target = $region5
    $region4: #{tpu_custom_call.1} parent=1 // pred_region
      %s15 = ssub.s32 2048, 2048
      %16 = vsyncadd [#allocation3], %s15
      %s17 = sshll.u32 [#allocation2], 4
      %s18 = int_to_ptr.vmem [resolvable:$true] %s17
      %23 = dma.hbm_to_vmem [thread:$0]  %s0, 2048, %s18, [#allocation3], 128, 128, 8
    $region5: #{tpu_custom_call.1} parent=1 // pred_fallthru
      _
    // Predicated region
    $region6: #{tpu_custom_call.1} parent=1 // pred_check
      _
    $region7: #{tpu_custom_call.1} parent=1 // pred_check_branch
      %25 = sbr.rel (0) target = $region9
    $region8: #{tpu_custom_call.1} parent=1 // pred_region
      %s27 = ssub.s32 2048, 2048
      %28 = vsyncadd [#allocation6], %s27
      %s29 = sshll.u32 [#allocation5], 4
      %s30 = int_to_ptr.vmem [resolvable:$true] %s29
      %35 = dma.hbm_to_vmem [thread:$0]  %s1, 2048, %s30, [#allocation6], 128, 128, 8
    $region9: #{tpu_custom_call.1} parent=1 // pred_fallthru
      _
    // Predicated region
    $region10: #{tpu_custom_call.1} parent=1 // pred_check
      _
    $region11: #{tpu_custom_call.1} parent=1 // pred_check_branch
      %37 = sbr.rel (0) target = $region13
    $region12: #{tpu_custom_call.1} parent=1 // pred_region
      _
    $region13: #{tpu_custom_call.1} parent=1 // pred_fallthru
      _
    // Predicated region
    $region14: #{tpu_custom_call.1} parent=1 // pred_check
      _
    $region15: #{tpu_custom_call.1} parent=1 // pred_check_branch
      %39 = sbr.rel (0) target = $region17
    $region16: #{tpu_custom_call.1} parent=1 // pred_region
      _
    $region17: #{tpu_custom_call.1} parent=1 // pred_fallthru
      _
    // Predicated region
    $region18: #{tpu_custom_call.1} parent=1 // pred_check
      _
    $region19: #{tpu_custom_call.1} parent=1 // pred_check_branch
      %41 = sbr.rel (0) target = $region21
    $region20: #{tpu_custom_call.1} parent=1 // pred_region
      %42 = dma.done [#allocation3], 2048
    $region21: #{tpu_custom_call.1} parent=1 // pred_fallthru
      _
    // Predicated region
    $region22: #{tpu_custom_call.1} parent=1 // pred_check
      _
    $region23: #{tpu_custom_call.1} parent=1 // pred_check_branch
      %44 = sbr.rel (0) target = $region25
    $region24: #{tpu_custom_call.1} parent=1 // pred_region
      %45 = dma.done [#allocation6], 2048
    $region25: #{tpu_custom_call.1} parent=1 // pred_fallthru
      _
    %v46 = vld [vmem:[#allocation2] sm:$0xff]
    %v47 = vld [vmem:[#allocation2 + $0x8] sm:$0xff]
    %v48 = vld [vmem:[#allocation2 + $0x10] sm:$0xff]
    %v49 = vld [vmem:[#allocation2 + $0x18] sm:$0xff]
    %v50 = vld [vmem:[#allocation2 + $0x20] sm:$0xff]
    %v51 = vld [vmem:[#allocation2 + $0x28] sm:$0xff]
    %v52 = vld [vmem:[#allocation2 + $0x30] sm:$0xff]
    %v53 = vld [vmem:[#allocation2 + $0x38] sm:$0xff]
    %v54 = vld [vmem:[#allocation2 + $0x40] sm:$0xff]
    %v55 = vld [vmem:[#allocation2 + $0x48] sm:$0xff]
    %v56 = vld [vmem:[#allocation2 + $0x50] sm:$0xff]
    %v57 = vld [vmem:[#allocation2 + $0x58] sm:$0xff]
    %v58 = vld [vmem:[#allocation2 + $0x60] sm:$0xff]
    %v59 = vld [vmem:[#allocation2 + $0x68] sm:$0xff]
    %v60 = vld [vmem:[#allocation2 + $0x70] sm:$0xff]
    %v61 = vld [vmem:[#allocation2 + $0x78] sm:$0xff]
    %v62 = vld [vmem:[%s2] sm:$0x1]
    %v63 = vld [vmem:[%s3] sm:$0x1]
    %v64 = vld [vmem:[#allocation5] sm:$0xff]
    %v65 = vld [vmem:[#allocation5 + $0x8] sm:$0xff]
    %v66 = vld [vmem:[#allocation5 + $0x10] sm:$0xff]
    %v67 = vld [vmem:[#allocation5 + $0x18] sm:$0xff]
    %vm68 = vcmask 261120
    %v70 = vsel %vm68, %v46, 0
    %v73 = vsel %vm68, %v47, 0
    %v76 = vsel %vm68, %v48, 0
    %v79 = vsel %vm68, %v49, 0
    %v82 = vsel %vm68, %v50, 0
    %v85 = vsel %vm68, %v51, 0
    %v88 = vsel %vm68, %v52, 0
    %v91 = vsel %vm68, %v53, 0
    %v94 = vsel %vm68, %v54, 0
    %v97 = vsel %vm68, %v55, 0
    %v100 = vsel %vm68, %v56, 0
    %v103 = vsel %vm68, %v57, 0
    %v106 = vsel %vm68, %v58, 0
    %v109 = vsel %vm68, %v59, 0
    %v112 = vsel %vm68, %v60, 0
    %v115 = vsel %vm68, %v61, 0
    %117 = vmatprep.subr.mxu0 0.0
    %118 = vmatpush1.msra.mxu0 0.0
    %119 = vmatprep.subr.mxu0 0.0
    %120 = vmatpush1.msra.mxu0 0.0
    %121 = vmatprep.subr.mxu0 0.0
    %122 = vmatpush1.msra.mxu0 0.0
    %123 = vmatprep.subr.mxu0 0.0
    %124 = vmatpush1.msra.mxu0 0.0
    %125 = vmatprep.subr.mxu0 0.0
    %126 = vmatpush1.msra.mxu0 0.0
    %127 = vmatprep.subr.mxu0 0.0
    %128 = vmatpush1.msra.mxu0 0.0
    %129 = vmatprep.subr.mxu0 0.0
    %130 = vmatpush1.msra.mxu0 0.0
    %131 = vmatprep.subr.mxu0 0.0
    %132 = vmatpush1.msra.mxu0 0.0
    %133 = vmatprep.subr.mxu0 0.0
    %134 = vmatpush1.msra.mxu0 0.0
    %135 = vmatprep.subr.mxu0 0.0
    %136 = vmatpush1.msra.mxu0 0.0
    %137 = vmatprep.subr.mxu0 0.0
    %138 = vmatpush1.msra.mxu0 0.0
    %139 = vmatprep.subr.mxu0 0.0
    %140 = vmatpush1.msra.mxu0 0.0
    %141 = vmatprep.subr.mxu0 0.0
    %142 = vmatpush1.msra.mxu0 %v67
    %143 = vmatprep.subr.mxu0 0.0
    %144 = vmatpush1.msra.mxu0 %v66
    %145 = vmatprep.subr.mxu0 0.0
    %146 = vmatpush1.msra.mxu0 %v65
    %147 = vmatprep.subr.mxu0 0.0
    %148 = vmatpush1.msra.mxu0 %v64
    %149 = vmatprep.subr.mxu0 0.0
    %150 = vmatpush2.msra.mxu0 0.0
    %151 = vmatprep.subr.mxu0 0.0
    %152 = vmatpush2.msra.mxu0 0.0
    %153 = vmatprep.subr.mxu0 0.0
    %154 = vmatpush2.msra.mxu0 0.0
    %155 = vmatprep.subr.mxu0 0.0
    %156 = vmatpush2.msra.mxu0 0.0
    %157 = vmatprep.subr.mxu0 0.0
    %158 = vmatpush2.msra.mxu0 0.0
    %159 = vmatprep.subr.mxu0 0.0
    %160 = vmatpush2.msra.mxu0 0.0
    %161 = vmatprep.subr.mxu0 0.0
    %162 = vmatpush2.msra.mxu0 0.0
    %163 = vmatprep.subr.mxu0 0.0
    %164 = vmatpush2.msra.mxu0 0.0
    %165 = vmatprep.subr.mxu0 0.0
    %166 = vmatpush2.msra.mxu0 0.0
    %167 = vmatprep.subr.mxu0 0.0
    %168 = vmatpush2.msra.mxu0 0.0
    %169 = vmatprep.subr.mxu0 0.0
    %170 = vmatpush2.msra.mxu0 0.0
    %171 = vmatprep.subr.mxu0 0.0
    %172 = vmatpush2.msra.mxu0 0.0
    %173 = vmatprep.subr.mxu0 0.0
    %174 = vmatpush2.msra.mxu0 0.0
    %175 = vmatprep.subr.mxu0 0.0
    %176 = vmatpush2.msra.mxu0 0.0
    %177 = vmatprep.subr.mxu0 0.0
    %178 = vmatpush2.msra.mxu0 0.0
    %179 = vmatprep.subr.mxu0 0.0
    %180 = vmatpush2.msra.mxu0 0.0
    %181 = vmatprep.mubr.f32.mxu0 0.0
    %182 = vmatmul.mubr.f32.gmra.mxu0 %v70
    %v183 = vpop.f32.mrf.mxu0
    %v184 = vadd.f32 0.0, %v183
    %v185 = vpop.f32.mrf.mxu0
    %186 = vmatprep.mubr.f32.mxu0 0.0
    %187 = vmatmul.mubr.f32.gmra.mxu0 %v73
    %v188 = vpop.f32.mrf.mxu0
    %v189 = vadd.f32 0.0, %v188
    %v190 = vpop.f32.mrf.mxu0
    %191 = vmatprep.mubr.f32.mxu0 0.0
    %192 = vmatmul.mubr.f32.gmra.mxu0 %v76
    %v193 = vpop.f32.mrf.mxu0
    %v194 = vadd.f32 0.0, %v193
    %v195 = vpop.f32.mrf.mxu0
    %196 = vmatprep.mubr.f32.mxu0 0.0
    %197 = vmatmul.mubr.f32.gmra.mxu0 %v79
    %v198 = vpop.f32.mrf.mxu0
    %v199 = vadd.f32 0.0, %v198
    %v200 = vpop.f32.mrf.mxu0
    %201 = vmatprep.mubr.f32.mxu0 0.0
    %202 = vmatmul.mubr.f32.gmra.mxu0 %v82
    %v203 = vpop.f32.mrf.mxu0
    %v204 = vadd.f32 0.0, %v203
    %v205 = vpop.f32.mrf.mxu0
    %206 = vmatprep.mubr.f32.mxu0 0.0
    %207 = vmatmul.mubr.f32.gmra.mxu0 %v85
    %v208 = vpop.f32.mrf.mxu0
    %v209 = vadd.f32 0.0, %v208
    %v210 = vpop.f32.mrf.mxu0
    %211 = vmatprep.mubr.f32.mxu0 0.0
    %212 = vmatmul.mubr.f32.gmra.mxu0 %v88
    %v213 = vpop.f32.mrf.mxu0
    %v214 = vadd.f32 0.0, %v213
    %v215 = vpop.f32.mrf.mxu0
    %216 = vmatprep.mubr.f32.mxu0 0.0
    %217 = vmatmul.mubr.f32.gmra.mxu0 %v91
    %v218 = vpop.f32.mrf.mxu0
    %v219 = vadd.f32 0.0, %v218
    %v220 = vpop.f32.mrf.mxu0
    %221 = vmatprep.mubr.f32.mxu0 0.0
    %222 = vmatmul.mubr.f32.gmra.mxu0 %v94
    %v223 = vpop.f32.mrf.mxu0
    %v224 = vadd.f32 0.0, %v223
    %v225 = vpop.f32.mrf.mxu0
    %226 = vmatprep.mubr.f32.mxu0 0.0
    %227 = vmatmul.mubr.f32.gmra.mxu0 %v97
    %v228 = vpop.f32.mrf.mxu0
    %v229 = vadd.f32 0.0, %v228
    %v230 = vpop.f32.mrf.mxu0
    %231 = vmatprep.mubr.f32.mxu0 0.0
    %232 = vmatmul.mubr.f32.gmra.mxu0 %v100
    %v233 = vpop.f32.mrf.mxu0
    %v234 = vadd.f32 0.0, %v233
    %v235 = vpop.f32.mrf.mxu0
    %236 = vmatprep.mubr.f32.mxu0 0.0
    %237 = vmatmul.mubr.f32.gmra.mxu0 %v103
    %v238 = vpop.f32.mrf.mxu0
    %v239 = vadd.f32 0.0, %v238
    %v240 = vpop.f32.mrf.mxu0
    %241 = vmatprep.mubr.f32.mxu0 0.0
    %242 = vmatmul.mubr.f32.gmra.mxu0 %v106
    %v243 = vpop.f32.mrf.mxu0
    %v244 = vadd.f32 0.0, %v243
    %v245 = vpop.f32.mrf.mxu0
    %246 = vmatprep.mubr.f32.mxu0 0.0
    %247 = vmatmul.mubr.f32.gmra.mxu0 %v109
    %v248 = vpop.f32.mrf.mxu0
    %v249 = vadd.f32 0.0, %v248
    %v250 = vpop.f32.mrf.mxu0
    %251 = vmatprep.mubr.f32.mxu0 0.0
    %252 = vmatmul.mubr.f32.gmra.mxu0 %v112
    %v253 = vpop.f32.mrf.mxu0
    %v254 = vadd.f32 0.0, %v253
    %v255 = vpop.f32.mrf.mxu0
    %256 = vmatprep.mubr.f32.mxu0 0.0
    %257 = vmatmul.mubr.f32.gmra.mxu0 %v115
    %v258 = vpop.f32.mrf.mxu0
    %v259 = vadd.f32 0.0, %v258
    %v260 = vpop.f32.mrf.mxu0
    %261 = vdwg.mxu0
    %v262 = vsel %vm68, %v184, 0.0
    %263 = vadd.xlane.f32.xlu0 %v262
    %v264 = vpop.xlane.xlu0 %263
    %v265 = vsel %vm68, %v189, 0.0
    %266 = vadd.xlane.f32.xlu0 %v265
    %v267 = vpop.xlane.xlu0 %266
    %v268 = vsel %vm68, %v194, 0.0
    %269 = vadd.xlane.f32.xlu0 %v268
    %v270 = vpop.xlane.xlu0 %269
    %v271 = vsel %vm68, %v199, 0.0
    %272 = vadd.xlane.f32.xlu0 %v271
    %v273 = vpop.xlane.xlu0 %272
    %v274 = vsel %vm68, %v204, 0.0
    %275 = vadd.xlane.f32.xlu0 %v274
    %v276 = vpop.xlane.xlu0 %275
    %v277 = vsel %vm68, %v209, 0.0
    %278 = vadd.xlane.f32.xlu0 %v277
    %v279 = vpop.xlane.xlu0 %278
    %v280 = vsel %vm68, %v214, 0.0
    %281 = vadd.xlane.f32.xlu0 %v280
    %v282 = vpop.xlane.xlu0 %281
    %v283 = vsel %vm68, %v219, 0.0
    %284 = vadd.xlane.f32.xlu0 %v283
    %v285 = vpop.xlane.xlu0 %284
    %v286 = vsel %vm68, %v224, 0.0
    %287 = vadd.xlane.f32.xlu0 %v286
    %v288 = vpop.xlane.xlu0 %287
    %v289 = vsel %vm68, %v229, 0.0
    %290 = vadd.xlane.f32.xlu0 %v289
    %v291 = vpop.xlane.xlu0 %290
    %v292 = vsel %vm68, %v234, 0.0
    %293 = vadd.xlane.f32.xlu0 %v292
    %v294 = vpop.xlane.xlu0 %293
    %v295 = vsel %vm68, %v239, 0.0
    %296 = vadd.xlane.f32.xlu0 %v295
    %v297 = vpop.xlane.xlu0 %296
    %v298 = vsel %vm68, %v244, 0.0
    %299 = vadd.xlane.f32.xlu0 %v298
    %v300 = vpop.xlane.xlu0 %299
    %v301 = vsel %vm68, %v249, 0.0
    %302 = vadd.xlane.f32.xlu0 %v301
    %v303 = vpop.xlane.xlu0 %302
    %v304 = vsel %vm68, %v254, 0.0
    %305 = vadd.xlane.f32.xlu0 %v304
    %v306 = vpop.xlane.xlu0 %305
    %v307 = vsel %vm68, %v259, 0.0
    %308 = vadd.xlane.f32.xlu0 %v307
    %v309 = vpop.xlane.xlu0 %308
    %v310 = vrcp.pop 32.0
    %v311 = vmul.f32 %v264, %v310
    %v312 = vmul.f32 %v267, %v310
    %v313 = vmul.f32 %v270, %v310
    %v314 = vmul.f32 %v273, %v310
    %v315 = vmul.f32 %v276, %v310
    %v316 = vmul.f32 %v279, %v310
    %v317 = vmul.f32 %v282, %v310
    %v318 = vmul.f32 %v285, %v310
    %v319 = vmul.f32 %v288, %v310
    %v320 = vmul.f32 %v291, %v310
    %v321 = vmul.f32 %v294, %v310
    %v322 = vmul.f32 %v297, %v310
    %v323 = vmul.f32 %v300, %v310
    %v324 = vmul.f32 %v303, %v310
    %v325 = vmul.f32 %v306, %v310
    %v326 = vmul.f32 %v309, %v310
    %v327 = vsub.f32 %v184, %v311
    %v328 = vsub.f32 %v189, %v312
    %v329 = vsub.f32 %v194, %v313
    %v330 = vsub.f32 %v199, %v314
    %v331 = vsub.f32 %v204, %v315
    %v332 = vsub.f32 %v209, %v316
    %v333 = vsub.f32 %v214, %v317
    %v334 = vsub.f32 %v219, %v318
    %v335 = vsub.f32 %v224, %v319
    %v336 = vsub.f32 %v229, %v320
    %v337 = vsub.f32 %v234, %v321
    %v338 = vsub.f32 %v239, %v322
    %v339 = vsub.f32 %v244, %v323
    %v340 = vsub.f32 %v249, %v324
    %v341 = vsub.f32 %v254, %v325
    %v342 = vsub.f32 %v259, %v326
    %v343 = vmul.f32 %v327, %v327
    %v344 = vmul.f32 %v328, %v328
    %v345 = vmul.f32 %v329, %v329
    %v346 = vmul.f32 %v330, %v330
    %v347 = vmul.f32 %v331, %v331
    %v348 = vmul.f32 %v332, %v332
    %v349 = vmul.f32 %v333, %v333
    %v350 = vmul.f32 %v334, %v334
    %v351 = vmul.f32 %v335, %v335
    %v352 = vmul.f32 %v336, %v336
    %v353 = vmul.f32 %v337, %v337
    %v354 = vmul.f32 %v338, %v338
    %v355 = vmul.f32 %v339, %v339
    %v356 = vmul.f32 %v340, %v340
    %v357 = vmul.f32 %v341, %v341
    %v358 = vmul.f32 %v342, %v342
    %v359 = vsel %vm68, %v343, 0.0
    %360 = vadd.xlane.f32.xlu0 %v359
    %v361 = vpop.xlane.xlu0 %360
    %v362 = vsel %vm68, %v344, 0.0
    %363 = vadd.xlane.f32.xlu0 %v362
    %v364 = vpop.xlane.xlu0 %363
    %v365 = vsel %vm68, %v345, 0.0
    %366 = vadd.xlane.f32.xlu0 %v365
    %v367 = vpop.xlane.xlu0 %366
    %v368 = vsel %vm68, %v346, 0.0
    %369 = vadd.xlane.f32.xlu0 %v368
    %v370 = vpop.xlane.xlu0 %369
    %v371 = vsel %vm68, %v347, 0.0
    %372 = vadd.xlane.f32.xlu0 %v371
    %v373 = vpop.xlane.xlu0 %372
    %v374 = vsel %vm68, %v348, 0.0
    %375 = vadd.xlane.f32.xlu0 %v374
    %v376 = vpop.xlane.xlu0 %375
    %v377 = vsel %vm68, %v349, 0.0
    %378 = vadd.xlane.f32.xlu0 %v377
    %v379 = vpop.xlane.xlu0 %378
    %v380 = vsel %vm68, %v350, 0.0
    %381 = vadd.xlane.f32.xlu0 %v380
    %v382 = vpop.xlane.xlu0 %381
    %v383 = vsel %vm68, %v351, 0.0
    %384 = vadd.xlane.f32.xlu0 %v383
    %v385 = vpop.xlane.xlu0 %384
    %v386 = vsel %vm68, %v352, 0.0
    %387 = vadd.xlane.f32.xlu0 %v386
    %v388 = vpop.xlane.xlu0 %387
    %v389 = vsel %vm68, %v353, 0.0
    %390 = vadd.xlane.f32.xlu0 %v389
    %v391 = vpop.xlane.xlu0 %390
    %v392 = vsel %vm68, %v354, 0.0
    %393 = vadd.xlane.f32.xlu0 %v392
    %v394 = vpop.xlane.xlu0 %393
    %v395 = vsel %vm68, %v355, 0.0
    %396 = vadd.xlane.f32.xlu0 %v395
    %v397 = vpop.xlane.xlu0 %396
    %v398 = vsel %vm68, %v356, 0.0
    %399 = vadd.xlane.f32.xlu0 %v398
    %v400 = vpop.xlane.xlu0 %399
    %v401 = vsel %vm68, %v357, 0.0
    %402 = vadd.xlane.f32.xlu0 %v401
    %v403 = vpop.xlane.xlu0 %402
    %v404 = vsel %vm68, %v358, 0.0
    %405 = vadd.xlane.f32.xlu0 %v404
    %v406 = vpop.xlane.xlu0 %405
    %v407 = vmul.f32 %v361, %v310
    %v408 = vmul.f32 %v364, %v310
    %v409 = vmul.f32 %v367, %v310
    %v410 = vmul.f32 %v370, %v310
    %v411 = vmul.f32 %v373, %v310
    %v412 = vmul.f32 %v376, %v310
    %v413 = vmul.f32 %v379, %v310
    %v414 = vmul.f32 %v382, %v310
    %v415 = vmul.f32 %v385, %v310
    %v416 = vmul.f32 %v388, %v310
    %v417 = vmul.f32 %v391, %v310
    %v418 = vmul.f32 %v394, %v310
    %v419 = vmul.f32 %v397, %v310
    %v420 = vmul.f32 %v400, %v310
    %v421 = vmul.f32 %v403, %v310
    %v422 = vmul.f32 %v406, %v310
    %v423 = vadd.f32 %v407, 1e-05
    %v424 = vadd.f32 %v408, 1e-05
    %v425 = vadd.f32 %v409, 1e-05
    %v426 = vadd.f32 %v410, 1e-05
    %v427 = vadd.f32 %v411, 1e-05
    %v428 = vadd.f32 %v412, 1e-05
    %v429 = vadd.f32 %v413, 1e-05
    %v430 = vadd.f32 %v414, 1e-05
    %v431 = vadd.f32 %v415, 1e-05
    %v432 = vadd.f32 %v416, 1e-05
    %v433 = vadd.f32 %v417, 1e-05
    %v434 = vadd.f32 %v418, 1e-05
    %v435 = vadd.f32 %v419, 1e-05
    %v436 = vadd.f32 %v420, 1e-05
    %v437 = vadd.f32 %v421, 1e-05
    %v438 = vadd.f32 %v422, 1e-05
    %v439 = vrsqrt.pop %v423
    %v440 = vrsqrt.pop %v424
    %v441 = vrsqrt.pop %v425
    %v442 = vrsqrt.pop %v426
    %v443 = vrsqrt.pop %v427
    %v444 = vrsqrt.pop %v428
    %v445 = vrsqrt.pop %v429
    %v446 = vrsqrt.pop %v430
    %v447 = vrsqrt.pop %v431
    %v448 = vrsqrt.pop %v432
    %v449 = vrsqrt.pop %v433
    %v450 = vrsqrt.pop %v434
    %v451 = vrsqrt.pop %v435
    %v452 = vrsqrt.pop %v436
    %v453 = vrsqrt.pop %v437
    %v454 = vrsqrt.pop %v438
    %v455 = vmul.f32 %v327, %v439
    %v456 = vmul.f32 %v328, %v440
    %v457 = vmul.f32 %v329, %v441
    %v458 = vmul.f32 %v330, %v442
    %v459 = vmul.f32 %v331, %v443
    %v460 = vmul.f32 %v332, %v444
    %v461 = vmul.f32 %v333, %v445
    %v462 = vmul.f32 %v334, %v446
    %v463 = vmul.f32 %v335, %v447
    %v464 = vmul.f32 %v336, %v448
    %v465 = vmul.f32 %v337, %v449
    %v466 = vmul.f32 %v338, %v450
    %v467 = vmul.f32 %v339, %v451
    %v468 = vmul.f32 %v340, %v452
    %v469 = vmul.f32 %v341, %v453
    %v470 = vmul.f32 %v342, %v454
    %v472 = vlaneseq
    %v473 = vshrl.u32 %v472, 7
    %v474 = vsub.s32 0, %v473
    %v475 = vrot.slane %v62, %v474
    %v477 = vmul.f32 %v455, %v475
    %v478 = vmul.f32 %v456, %v475
    %v479 = vmul.f32 %v457, %v475
    %v480 = vmul.f32 %v458, %v475
    %v481 = vmul.f32 %v459, %v475
    %v482 = vmul.f32 %v460, %v475
    %v483 = vmul.f32 %v461, %v475
    %v484 = vmul.f32 %v462, %v475
    %v485 = vmul.f32 %v463, %v475
    %v486 = vmul.f32 %v464, %v475
    %v487 = vmul.f32 %v465, %v475
    %v488 = vmul.f32 %v466, %v475
    %v489 = vmul.f32 %v467, %v475
    %v490 = vmul.f32 %v468, %v475
    %v491 = vmul.f32 %v469, %v475
    %v492 = vmul.f32 %v470, %v475
    %v494 = vlaneseq
    %v495 = vshrl.u32 %v494, 7
    %v496 = vsub.s32 0, %v495
    %v497 = vrot.slane %v63, %v496
    %v499 = vadd.f32 %v477, %v497
    %v500 = vadd.f32 %v478, %v497
    %v501 = vadd.f32 %v479, %v497
    %v502 = vadd.f32 %v480, %v497
    %v503 = vadd.f32 %v481, %v497
    %v504 = vadd.f32 %v482, %v497
    %v505 = vadd.f32 %v483, %v497
    %v506 = vadd.f32 %v484, %v497
    %v507 = vadd.f32 %v485, %v497
    %v508 = vadd.f32 %v486, %v497
    %v509 = vadd.f32 %v487, %v497
    %v510 = vadd.f32 %v488, %v497
    %v511 = vadd.f32 %v489, %v497
    %v512 = vadd.f32 %v490, %v497
    %v513 = vadd.f32 %v491, %v497
    %v514 = vadd.f32 %v492, %v497
    %s515 = scalar_lea.vmem [#allocation5], 32
    %v516 = vld [vmem:[%s515] sm:$0xff]
    %v517 = vld [vmem:[%s515 + $0x8] sm:$0xff]
    %v518 = vld [vmem:[%s515 + $0x10] sm:$0xff]
    %v519 = vld [vmem:[%s515 + $0x18] sm:$0xff]
    %520 = vmatprep.subr.mxu0 0.0
    %521 = vmatpush1.msra.mxu0 0.0
    %522 = vmatprep.subr.mxu0 0.0
    %523 = vmatpush1.msra.mxu0 0.0
    %524 = vmatprep.subr.mxu0 0.0
    %525 = vmatpush1.msra.mxu0 0.0
    %526 = vmatprep.subr.mxu0 0.0
    %527 = vmatpush1.msra.mxu0 0.0
    %528 = vmatprep.subr.mxu0 0.0
    %529 = vmatpush1.msra.mxu0 0.0
    %530 = vmatprep.subr.mxu0 0.0
    %531 = vmatpush1.msra.mxu0 0.0
    %532 = vmatprep.subr.mxu0 0.0
    %533 = vmatpush1.msra.mxu0 0.0
    %534 = vmatprep.subr.mxu0 0.0
    %535 = vmatpush1.msra.mxu0 0.0
    %536 = vmatprep.subr.mxu0 0.0
    %537 = vmatpush1.msra.mxu0 0.0
    %538 = vmatprep.subr.mxu0 0.0
    %539 = vmatpush1.msra.mxu0 0.0
    %540 = vmatprep.subr.mxu0 0.0
    %541 = vmatpush1.msra.mxu0 0.0
    %542 = vmatprep.subr.mxu0 0.0
    %543 = vmatpush1.msra.mxu0 0.0
    %544 = vmatprep.subr.mxu0 0.0
    %545 = vmatpush1.msra.mxu0 %v519
    %546 = vmatprep.subr.mxu0 0.0
    %547 = vmatpush1.msra.mxu0 %v518
    %548 = vmatprep.subr.mxu0 0.0
    %549 = vmatpush1.msra.mxu0 %v517
    %550 = vmatprep.subr.mxu0 0.0
    %551 = vmatpush1.msra.mxu0 %v516
    %552 = vmatprep.subr.mxu0 0.0
    %553 = vmatpush2.msra.mxu0 0.0
    %554 = vmatprep.subr.mxu0 0.0
    %555 = vmatpush2.msra.mxu0 0.0
    %556 = vmatprep.subr.mxu0 0.0
    %557 = vmatpush2.msra.mxu0 0.0
    %558 = vmatprep.subr.mxu0 0.0
    %559 = vmatpush2.msra.mxu0 0.0
    %560 = vmatprep.subr.mxu0 0.0
    %561 = vmatpush2.msra.mxu0 0.0
    %562 = vmatprep.subr.mxu0 0.0
    %563 = vmatpush2.msra.mxu0 0.0
    %564 = vmatprep.subr.mxu0 0.0
    %565 = vmatpush2.msra.mxu0 0.0
    %566 = vmatprep.subr.mxu0 0.0
    %567 = vmatpush2.msra.mxu0 0.0
    %568 = vmatprep.subr.mxu0 0.0
    %569 = vmatpush2.msra.mxu0 0.0
    %570 = vmatprep.subr.mxu0 0.0
    %571 = vmatpush2.msra.mxu0 0.0
    %572 = vmatprep.subr.mxu0 0.0
    %573 = vmatpush2.msra.mxu0 0.0
    %574 = vmatprep.subr.mxu0 0.0
    %575 = vmatpush2.msra.mxu0 0.0
    %576 = vmatprep.subr.mxu0 0.0
    %577 = vmatpush2.msra.mxu0 0.0
    %578 = vmatprep.subr.mxu0 0.0
    %579 = vmatpush2.msra.mxu0 0.0
    %580 = vmatprep.subr.mxu0 0.0
    %581 = vmatpush2.msra.mxu0 0.0
    %582 = vmatprep.subr.mxu0 0.0
    %583 = vmatpush2.msra.mxu0 0.0
    %584 = vmatprep.mubr.f32.mxu0 0.0
    %585 = vmatmul.mubr.f32.gmra.mxu0 %v70
    %v586 = vpop.f32.mrf.mxu0
    %v587 = vadd.f32 0.0, %v586
    %v588 = vpop.f32.mrf.mxu0
    %589 = vmatprep.mubr.f32.mxu0 0.0
    %590 = vmatmul.mubr.f32.gmra.mxu0 %v73
    %v591 = vpop.f32.mrf.mxu0
    %v592 = vadd.f32 0.0, %v591
    %v593 = vpop.f32.mrf.mxu0
    %594 = vmatprep.mubr.f32.mxu0 0.0
    %595 = vmatmul.mubr.f32.gmra.mxu0 %v76
    %v596 = vpop.f32.mrf.mxu0
    %v597 = vadd.f32 0.0, %v596
    %v598 = vpop.f32.mrf.mxu0
    %599 = vmatprep.mubr.f32.mxu0 0.0
    %600 = vmatmul.mubr.f32.gmra.mxu0 %v79
    %v601 = vpop.f32.mrf.mxu0
    %v602 = vadd.f32 0.0, %v601
    %v603 = vpop.f32.mrf.mxu0
    %604 = vmatprep.mubr.f32.mxu0 0.0
    %605 = vmatmul.mubr.f32.gmra.mxu0 %v82
    %v606 = vpop.f32.mrf.mxu0
    %v607 = vadd.f32 0.0, %v606
    %v608 = vpop.f32.mrf.mxu0
    %609 = vmatprep.mubr.f32.mxu0 0.0
    %610 = vmatmul.mubr.f32.gmra.mxu0 %v85
    %v611 = vpop.f32.mrf.mxu0
    %v612 = vadd.f32 0.0, %v611
    %v613 = vpop.f32.mrf.mxu0
    %614 = vmatprep.mubr.f32.mxu0 0.0
    %615 = vmatmul.mubr.f32.gmra.mxu0 %v88
    %v616 = vpop.f32.mrf.mxu0
    %v617 = vadd.f32 0.0, %v616
    %v618 = vpop.f32.mrf.mxu0
    %619 = vmatprep.mubr.f32.mxu0 0.0
    %620 = vmatmul.mubr.f32.gmra.mxu0 %v91
    %v621 = vpop.f32.mrf.mxu0
    %v622 = vadd.f32 0.0, %v621
    %v623 = vpop.f32.mrf.mxu0
    %624 = vmatprep.mubr.f32.mxu0 0.0
    %625 = vmatmul.mubr.f32.gmra.mxu0 %v94
    %v626 = vpop.f32.mrf.mxu0
    %v627 = vadd.f32 0.0, %v626
    %v628 = vpop.f32.mrf.mxu0
    %629 = vmatprep.mubr.f32.mxu0 0.0
    %630 = vmatmul.mubr.f32.gmra.mxu0 %v97
    %v631 = vpop.f32.mrf.mxu0
    %v632 = vadd.f32 0.0, %v631
    %v633 = vpop.f32.mrf.mxu0
    %634 = vmatprep.mubr.f32.mxu0 0.0
    %635 = vmatmul.mubr.f32.gmra.mxu0 %v100
    %v636 = vpop.f32.mrf.mxu0
    %v637 = vadd.f32 0.0, %v636
    %v638 = vpop.f32.mrf.mxu0
    %639 = vmatprep.mubr.f32.mxu0 0.0
    %640 = vmatmul.mubr.f32.gmra.mxu0 %v103
    %v641 = vpop.f32.mrf.mxu0
    %v642 = vadd.f32 0.0, %v641
    %v643 = vpop.f32.mrf.mxu0
    %644 = vmatprep.mubr.f32.mxu0 0.0
    %645 = vmatmul.mubr.f32.gmra.mxu0 %v106
    %v646 = vpop.f32.mrf.mxu0
    %v647 = vadd.f32 0.0, %v646
    %v648 = vpop.f32.mrf.mxu0
    %649 = vmatprep.mubr.f32.mxu0 0.0
    %650 = vmatmul.mubr.f32.gmra.mxu0 %v109
    %v651 = vpop.f32.mrf.mxu0
    %v652 = vadd.f32 0.0, %v651
    %v653 = vpop.f32.mrf.mxu0
    %654 = vmatprep.mubr.f32.mxu0 0.0
    %655 = vmatmul.mubr.f32.gmra.mxu0 %v112
    %v656 = vpop.f32.mrf.mxu0
    %v657 = vadd.f32 0.0, %v656
    %v658 = vpop.f32.mrf.mxu0
    %659 = vmatprep.mubr.f32.mxu0 0.0
    %660 = vmatmul.mubr.f32.gmra.mxu0 %v115
    %v661 = vpop.f32.mrf.mxu0
    %v662 = vadd.f32 0.0, %v661
    %v663 = vpop.f32.mrf.mxu0
    %664 = vdwg.mxu0
    %v665 = vsel %vm68, %v587, 0.0
    %666 = vadd.xlane.f32.xlu0 %v665
    %v667 = vpop.xlane.xlu0 %666
    %v668 = vsel %vm68, %v592, 0.0
    %669 = vadd.xlane.f32.xlu0 %v668
    %v670 = vpop.xlane.xlu0 %669
    %v671 = vsel %vm68, %v597, 0.0
    %672 = vadd.xlane.f32.xlu0 %v671
    %v673 = vpop.xlane.xlu0 %672
    %v674 = vsel %vm68, %v602, 0.0
    %675 = vadd.xlane.f32.xlu0 %v674
    %v676 = vpop.xlane.xlu0 %675
    %v677 = vsel %vm68, %v607, 0.0
    %678 = vadd.xlane.f32.xlu0 %v677
    %v679 = vpop.xlane.xlu0 %678
    %v680 = vsel %vm68, %v612, 0.0
    %681 = vadd.xlane.f32.xlu0 %v680
    %v682 = vpop.xlane.xlu0 %681
    %v683 = vsel %vm68, %v617, 0.0
    %684 = vadd.xlane.f32.xlu0 %v683
    %v685 = vpop.xlane.xlu0 %684
    %v686 = vsel %vm68, %v622, 0.0
    %687 = vadd.xlane.f32.xlu0 %v686
    %v688 = vpop.xlane.xlu0 %687
    %v689 = vsel %vm68, %v627, 0.0
    %690 = vadd.xlane.f32.xlu0 %v689
    %v691 = vpop.xlane.xlu0 %690
    %v692 = vsel %vm68, %v632, 0.0
    %693 = vadd.xlane.f32.xlu0 %v692
    %v694 = vpop.xlane.xlu0 %693
    %v695 = vsel %vm68, %v637, 0.0
    %696 = vadd.xlane.f32.xlu0 %v695
    %v697 = vpop.xlane.xlu0 %696
    %v698 = vsel %vm68, %v642, 0.0
    %699 = vadd.xlane.f32.xlu0 %v698
    %v700 = vpop.xlane.xlu0 %699
    %v701 = vsel %vm68, %v647, 0.0
    %702 = vadd.xlane.f32.xlu0 %v701
    %v703 = vpop.xlane.xlu0 %702
    %v704 = vsel %vm68, %v652, 0.0
    %705 = vadd.xlane.f32.xlu0 %v704
    %v706 = vpop.xlane.xlu0 %705
    %v707 = vsel %vm68, %v657, 0.0
    %708 = vadd.xlane.f32.xlu0 %v707
    %v709 = vpop.xlane.xlu0 %708
    %v710 = vsel %vm68, %v662, 0.0
    %711 = vadd.xlane.f32.xlu0 %v710
    %v712 = vpop.xlane.xlu0 %711
    %v713 = vmul.f32 %v667, %v310
    %v714 = vmul.f32 %v670, %v310
    %v715 = vmul.f32 %v673, %v310
    %v716 = vmul.f32 %v676, %v310
    %v717 = vmul.f32 %v679, %v310
    %v718 = vmul.f32 %v682, %v310
    %v719 = vmul.f32 %v685, %v310
    %v720 = vmul.f32 %v688, %v310
    %v721 = vmul.f32 %v691, %v310
    %v722 = vmul.f32 %v694, %v310
    %v723 = vmul.f32 %v697, %v310
    %v724 = vmul.f32 %v700, %v310
    %v725 = vmul.f32 %v703, %v310
    %v726 = vmul.f32 %v706, %v310
    %v727 = vmul.f32 %v709, %v310
    %v728 = vmul.f32 %v712, %v310
    %v729 = vsub.f32 %v587, %v713
    %v730 = vsub.f32 %v592, %v714
    %v731 = vsub.f32 %v597, %v715
    %v732 = vsub.f32 %v602, %v716
    %v733 = vsub.f32 %v607, %v717
    %v734 = vsub.f32 %v612, %v718
    %v735 = vsub.f32 %v617, %v719
    %v736 = vsub.f32 %v622, %v720
    %v737 = vsub.f32 %v627, %v721
    %v738 = vsub.f32 %v632, %v722
    %v739 = vsub.f32 %v637, %v723
    %v740 = vsub.f32 %v642, %v724
    %v741 = vsub.f32 %v647, %v725
    %v742 = vsub.f32 %v652, %v726
    %v743 = vsub.f32 %v657, %v727
    %v744 = vsub.f32 %v662, %v728
    %v745 = vmul.f32 %v729, %v729
    %v746 = vmul.f32 %v730, %v730
    %v747 = vmul.f32 %v731, %v731
    %v748 = vmul.f32 %v732, %v732
    %v749 = vmul.f32 %v733, %v733
    %v750 = vmul.f32 %v734, %v734
    %v751 = vmul.f32 %v735, %v735
    %v752 = vmul.f32 %v736, %v736
    %v753 = vmul.f32 %v737, %v737
    %v754 = vmul.f32 %v738, %v738
    %v755 = vmul.f32 %v739, %v739
    %v756 = vmul.f32 %v740, %v740
    %v757 = vmul.f32 %v741, %v741
    %v758 = vmul.f32 %v742, %v742
    %v759 = vmul.f32 %v743, %v743
    %v760 = vmul.f32 %v744, %v744
    %v761 = vsel %vm68, %v745, 0.0
    %762 = vadd.xlane.f32.xlu0 %v761
    %v763 = vpop.xlane.xlu0 %762
    %v764 = vsel %vm68, %v746, 0.0
    %765 = vadd.xlane.f32.xlu0 %v764
    %v766 = vpop.xlane.xlu0 %765
    %v767 = vsel %vm68, %v747, 0.0
    %768 = vadd.xlane.f32.xlu0 %v767
    %v769 = vpop.xlane.xlu0 %768
    %v770 = vsel %vm68, %v748, 0.0
    %771 = vadd.xlane.f32.xlu0 %v770
    %v772 = vpop.xlane.xlu0 %771
    %v773 = vsel %vm68, %v749, 0.0
    %774 = vadd.xlane.f32.xlu0 %v773
    %v775 = vpop.xlane.xlu0 %774
    %v776 = vsel %vm68, %v750, 0.0
    %777 = vadd.xlane.f32.xlu0 %v776
    %v778 = vpop.xlane.xlu0 %777
    %v779 = vsel %vm68, %v751, 0.0
    %780 = vadd.xlane.f32.xlu0 %v779
    %v781 = vpop.xlane.xlu0 %780
    %v782 = vsel %vm68, %v752, 0.0
    %783 = vadd.xlane.f32.xlu0 %v782
    %v784 = vpop.xlane.xlu0 %783
    %v785 = vsel %vm68, %v753, 0.0
    %786 = vadd.xlane.f32.xlu0 %v785
    %v787 = vpop.xlane.xlu0 %786
    %v788 = vsel %vm68, %v754, 0.0
    %789 = vadd.xlane.f32.xlu0 %v788
    %v790 = vpop.xlane.xlu0 %789
    %v791 = vsel %vm68, %v755, 0.0
    %792 = vadd.xlane.f32.xlu0 %v791
    %v793 = vpop.xlane.xlu0 %792
    %v794 = vsel %vm68, %v756, 0.0
    %795 = vadd.xlane.f32.xlu0 %v794
    %v796 = vpop.xlane.xlu0 %795
    %v797 = vsel %vm68, %v757, 0.0
    %798 = vadd.xlane.f32.xlu0 %v797
    %v799 = vpop.xlane.xlu0 %798
    %v800 = vsel %vm68, %v758, 0.0
    %801 = vadd.xlane.f32.xlu0 %v800
    %v802 = vpop.xlane.xlu0 %801
    %v803 = vsel %vm68, %v759, 0.0
    %804 = vadd.xlane.f32.xlu0 %v803
    %v805 = vpop.xlane.xlu0 %804
    %v806 = vsel %vm68, %v760, 0.0
    %807 = vadd.xlane.f32.xlu0 %v806
    %v808 = vpop.xlane.xlu0 %807
    %v809 = vmul.f32 %v763, %v310
    %v810 = vmul.f32 %v766, %v310
    %v811 = vmul.f32 %v769, %v310
    %v812 = vmul.f32 %v772, %v310
    %v813 = vmul.f32 %v775, %v310
    %v814 = vmul.f32 %v778, %v310
    %v815 = vmul.f32 %v781, %v310
    %v816 = vmul.f32 %v784, %v310
    %v817 = vmul.f32 %v787, %v310
    %v818 = vmul.f32 %v790, %v310
    %v819 = vmul.f32 %v793, %v310
    %v820 = vmul.f32 %v796, %v310
    %v821 = vmul.f32 %v799, %v310
    %v822 = vmul.f32 %v802, %v310
    %v823 = vmul.f32 %v805, %v310
    %v824 = vmul.f32 %v808, %v310
    %v825 = vadd.f32 %v809, 1e-05
    %v826 = vadd.f32 %v810, 1e-05
    %v827 = vadd.f32 %v811, 1e-05
    %v828 = vadd.f32 %v812, 1e-05
    %v829 = vadd.f32 %v813, 1e-05
    %v830 = vadd.f32 %v814, 1e-05
    %v831 = vadd.f32 %v815, 1e-05
    %v832 = vadd.f32 %v816, 1e-05
    %v833 = vadd.f32 %v817, 1e-05
    %v834 = vadd.f32 %v818, 1e-05
    %v835 = vadd.f32 %v819, 1e-05
    %v836 = vadd.f32 %v820, 1e-05
    %v837 = vadd.f32 %v821, 1e-05
    %v838 = vadd.f32 %v822, 1e-05
    %v839 = vadd.f32 %v823, 1e-05
    %v840 = vadd.f32 %v824, 1e-05
    %v841 = vrsqrt.pop %v825
    %v842 = vrsqrt.pop %v826
    %v843 = vrsqrt.pop %v827
    %v844 = vrsqrt.pop %v828
    %v845 = vrsqrt.pop %v829
    %v846 = vrsqrt.pop %v830
    %v847 = vrsqrt.pop %v831
    %v848 = vrsqrt.pop %v832
    %v849 = vrsqrt.pop %v833
    %v850 = vrsqrt.pop %v834
    %v851 = vrsqrt.pop %v835
    %v852 = vrsqrt.pop %v836
    %v853 = vrsqrt.pop %v837
    %v854 = vrsqrt.pop %v838
    %v855 = vrsqrt.pop %v839
    %v856 = vrsqrt.pop %v840
    %v857 = vmul.f32 %v729, %v841
    %v858 = vmul.f32 %v730, %v842
    %v859 = vmul.f32 %v731, %v843
    %v860 = vmul.f32 %v732, %v844
    %v861 = vmul.f32 %v733, %v845
    %v862 = vmul.f32 %v734, %v846
    %v863 = vmul.f32 %v735, %v847
    %v864 = vmul.f32 %v736, %v848
    %v865 = vmul.f32 %v737, %v849
    %v866 = vmul.f32 %v738, %v850
    %v867 = vmul.f32 %v739, %v851
    %v868 = vmul.f32 %v740, %v852
    %v869 = vmul.f32 %v741, %v853
    %v870 = vmul.f32 %v742, %v854
    %v871 = vmul.f32 %v743, %v855
    %v872 = vmul.f32 %v744, %v856
    %v873 = vmul.f32 %v857, %v475
    %v874 = vmul.f32 %v858, %v475
    %v875 = vmul.f32 %v859, %v475
    %v876 = vmul.f32 %v860, %v475
    %v877 = vmul.f32 %v861, %v475
    %v878 = vmul.f32 %v862, %v475
    %v879 = vmul.f32 %v863, %v475
    %v880 = vmul.f32 %v864, %v475
    %v881 = vmul.f32 %v865, %v475
    %v882 = vmul.f32 %v866, %v475
    %v883 = vmul.f32 %v867, %v475
    %v884 = vmul.f32 %v868, %v475
    %v885 = vmul.f32 %v869, %v475
    %v886 = vmul.f32 %v870, %v475
    %v887 = vmul.f32 %v871, %v475
    %v888 = vmul.f32 %v872, %v475
    %v889 = vadd.f32 %v873, %v497
    %v890 = vadd.f32 %v874, %v497
    %v891 = vadd.f32 %v875, %v497
    %v892 = vadd.f32 %v876, %v497
    %v893 = vadd.f32 %v877, %v497
    %v894 = vadd.f32 %v878, %v497
    %v895 = vadd.f32 %v879, %v497
    %v896 = vadd.f32 %v880, %v497
    %v897 = vadd.f32 %v881, %v497
    %v898 = vadd.f32 %v882, %v497
    %v899 = vadd.f32 %v883, %v497
    %v900 = vadd.f32 %v884, %v497
    %v901 = vadd.f32 %v885, %v497
    %v902 = vadd.f32 %v886, %v497
    %v903 = vadd.f32 %v887, %v497
    %v904 = vadd.f32 %v888, %v497
    %921 = vrot.lane.b32.xlu0 %v889, 32
    %v922 = vpop.permute.xlu0 %921
    %923 = vrot.lane.b32.xlu0 %v890, 32
    %v924 = vpop.permute.xlu0 %923
    %925 = vrot.lane.b32.xlu0 %v891, 32
    %v926 = vpop.permute.xlu0 %925
    %927 = vrot.lane.b32.xlu0 %v892, 32
    %v928 = vpop.permute.xlu0 %927
    %929 = vrot.lane.b32.xlu0 %v893, 32
    %v930 = vpop.permute.xlu0 %929
    %931 = vrot.lane.b32.xlu0 %v894, 32
    %v932 = vpop.permute.xlu0 %931
    %933 = vrot.lane.b32.xlu0 %v895, 32
    %v934 = vpop.permute.xlu0 %933
    %935 = vrot.lane.b32.xlu0 %v896, 32
    %v936 = vpop.permute.xlu0 %935
    %937 = vrot.lane.b32.xlu0 %v897, 32
    %v938 = vpop.permute.xlu0 %937
    %939 = vrot.lane.b32.xlu0 %v898, 32
    %v940 = vpop.permute.xlu0 %939
    %941 = vrot.lane.b32.xlu0 %v899, 32
    %v942 = vpop.permute.xlu0 %941
    %943 = vrot.lane.b32.xlu0 %v900, 32
    %v944 = vpop.permute.xlu0 %943
    %945 = vrot.lane.b32.xlu0 %v901, 32
    %v946 = vpop.permute.xlu0 %945
    %947 = vrot.lane.b32.xlu0 %v902, 32
    %v948 = vpop.permute.xlu0 %947
    %949 = vrot.lane.b32.xlu0 %v903, 32
    %v950 = vpop.permute.xlu0 %949
    %951 = vrot.lane.b32.xlu0 %v904, 32
    %v952 = vpop.permute.xlu0 %951
    %v969 = vsel %vm68, %v499, %v922
    %v970 = vsel %vm68, %v500, %v924
    %v971 = vsel %vm68, %v501, %v926
    %v972 = vsel %vm68, %v502, %v928
    %v973 = vsel %vm68, %v503, %v930
    %v974 = vsel %vm68, %v504, %v932
    %v975 = vsel %vm68, %v505, %v934
    %v976 = vsel %vm68, %v506, %v936
    %v977 = vsel %vm68, %v507, %v938
    %v978 = vsel %vm68, %v508, %v940
    %v979 = vsel %vm68, %v509, %v942
    %v980 = vsel %vm68, %v510, %v944
    %v981 = vsel %vm68, %v511, %v946
    %v982 = vsel %vm68, %v512, %v948
    %v983 = vsel %vm68, %v513, %v950
    %v984 = vsel %vm68, %v514, %v952
    %vm985 = vcmask 523264
    %986 = vst.msk [vmem:[#allocation7] sm:$0xff] %vm985, %v969
    %987 = vst.msk [vmem:[#allocation7 + $0x10] sm:$0xff] %vm985, %v970
    %988 = vst.msk [vmem:[#allocation7 + $0x20] sm:$0xff] %vm985, %v971
    %989 = vst.msk [vmem:[#allocation7 + $0x30] sm:$0xff] %vm985, %v972
    %990 = vst.msk [vmem:[#allocation7 + $0x40] sm:$0xff] %vm985, %v973
    %991 = vst.msk [vmem:[#allocation7 + $0x50] sm:$0xff] %vm985, %v974
    %992 = vst.msk [vmem:[#allocation7 + $0x60] sm:$0xff] %vm985, %v975
    %993 = vst.msk [vmem:[#allocation7 + $0x70] sm:$0xff] %vm985, %v976
    %994 = vst.msk [vmem:[#allocation7 + $0x80] sm:$0xff] %vm985, %v977
    %995 = vst.msk [vmem:[#allocation7 + $0x90] sm:$0xff] %vm985, %v978
    %996 = vst.msk [vmem:[#allocation7 + $0xa0] sm:$0xff] %vm985, %v979
    %997 = vst.msk [vmem:[#allocation7 + $0xb0] sm:$0xff] %vm985, %v980
    %998 = vst.msk [vmem:[#allocation7 + $0xc0] sm:$0xff] %vm985, %v981
    %999 = vst.msk [vmem:[#allocation7 + $0xd0] sm:$0xff] %vm985, %v982
    %1000 = vst.msk [vmem:[#allocation7 + $0xe0] sm:$0xff] %vm985, %v983
    %1001 = vst.msk [vmem:[#allocation7 + $0xf0] sm:$0xff] %vm985, %v984
    %s1002 = scalar_lea.vmem [#allocation5], 64
    %v1003 = vld [vmem:[%s1002] sm:$0xff]
    %v1004 = vld [vmem:[%s1002 + $0x8] sm:$0xff]
    %v1005 = vld [vmem:[%s1002 + $0x10] sm:$0xff]
    %v1006 = vld [vmem:[%s1002 + $0x18] sm:$0xff]
    %1007 = vmatprep.subr.mxu0 0.0
    %1008 = vmatpush1.msra.mxu0 0.0
    %1009 = vmatprep.subr.mxu0 0.0
    %1010 = vmatpush1.msra.mxu0 0.0
    %1011 = vmatprep.subr.mxu0 0.0
    %1012 = vmatpush1.msra.mxu0 0.0
    %1013 = vmatprep.subr.mxu0 0.0
    %1014 = vmatpush1.msra.mxu0 0.0
    %1015 = vmatprep.subr.mxu0 0.0
    %1016 = vmatpush1.msra.mxu0 0.0
    %1017 = vmatprep.subr.mxu0 0.0
    %1018 = vmatpush1.msra.mxu0 0.0
    %1019 = vmatprep.subr.mxu0 0.0
    %1020 = vmatpush1.msra.mxu0 0.0
    %1021 = vmatprep.subr.mxu0 0.0
    %1022 = vmatpush1.msra.mxu0 0.0
    %1023 = vmatprep.subr.mxu0 0.0
    %1024 = vmatpush1.msra.mxu0 0.0
    %1025 = vmatprep.subr.mxu0 0.0
    %1026 = vmatpush1.msra.mxu0 0.0
    %1027 = vmatprep.subr.mxu0 0.0
    %1028 = vmatpush1.msra.mxu0 0.0
    %1029 = vmatprep.subr.mxu0 0.0
    %1030 = vmatpush1.msra.mxu0 0.0
    %1031 = vmatprep.subr.mxu0 0.0
    %1032 = vmatpush1.msra.mxu0 %v1006
    %1033 = vmatprep.subr.mxu0 0.0
    %1034 = vmatpush1.msra.mxu0 %v1005
    %1035 = vmatprep.subr.mxu0 0.0
    %1036 = vmatpush1.msra.mxu0 %v1004
    %1037 = vmatprep.subr.mxu0 0.0
    %1038 = vmatpush1.msra.mxu0 %v1003
    %1039 = vmatprep.subr.mxu0 0.0
    %1040 = vmatpush2.msra.mxu0 0.0
    %1041 = vmatprep.subr.mxu0 0.0
    %1042 = vmatpush2.msra.mxu0 0.0
    %1043 = vmatprep.subr.mxu0 0.0
    %1044 = vmatpush2.msra.mxu0 0.0
    %1045 = vmatprep.subr.mxu0 0.0
    %1046 = vmatpush2.msra.mxu0 0.0
    %1047 = vmatprep.subr.mxu0 0.0
    %1048 = vmatpush2.msra.mxu0 0.0
    %1049 = vmatprep.subr.mxu0 0.0
    %1050 = vmatpush2.msra.mxu0 0.0
    %1051 = vmatprep.subr.mxu0 0.0
    %1052 = vmatpush2.msra.mxu0 0.0
    %1053 = vmatprep.subr.mxu0 0.0
    %1054 = vmatpush2.msra.mxu0 0.0
    %1055 = vmatprep.subr.mxu0 0.0
    %1056 = vmatpush2.msra.mxu0 0.0
    %1057 = vmatprep.subr.mxu0 0.0
    %1058 = vmatpush2.msra.mxu0 0.0
    %1059 = vmatprep.subr.mxu0 0.0
    %1060 = vmatpush2.msra.mxu0 0.0
    %1061 = vmatprep.subr.mxu0 0.0
    %1062 = vmatpush2.msra.mxu0 0.0
    %1063 = vmatprep.subr.mxu0 0.0
    %1064 = vmatpush2.msra.mxu0 0.0
    %1065 = vmatprep.subr.mxu0 0.0
    %1066 = vmatpush2.msra.mxu0 0.0
    %1067 = vmatprep.subr.mxu0 0.0
    %1068 = vmatpush2.msra.mxu0 0.0
    %1069 = vmatprep.subr.mxu0 0.0
    %1070 = vmatpush2.msra.mxu0 0.0
    %1071 = vmatprep.mubr.f32.mxu0 0.0
    %1072 = vmatmul.mubr.f32.gmra.mxu0 %v70
    %v1073 = vpop.f32.mrf.mxu0
    %v1074 = vadd.f32 0.0, %v1073
    %v1075 = vpop.f32.mrf.mxu0
    %1076 = vmatprep.mubr.f32.mxu0 0.0
    %1077 = vmatmul.mubr.f32.gmra.mxu0 %v73
    %v1078 = vpop.f32.mrf.mxu0
    %v1079 = vadd.f32 0.0, %v1078
    %v1080 = vpop.f32.mrf.mxu0
    %1081 = vmatprep.mubr.f32.mxu0 0.0
    %1082 = vmatmul.mubr.f32.gmra.mxu0 %v76
    %v1083 = vpop.f32.mrf.mxu0
    %v1084 = vadd.f32 0.0, %v1083
    %v1085 = vpop.f32.mrf.mxu0
    %1086 = vmatprep.mubr.f32.mxu0 0.0
    %1087 = vmatmul.mubr.f32.gmra.mxu0 %v79
    %v1088 = vpop.f32.mrf.mxu0
    %v1089 = vadd.f32 0.0, %v1088
    %v1090 = vpop.f32.mrf.mxu0
    %1091 = vmatprep.mubr.f32.mxu0 0.0
    %1092 = vmatmul.mubr.f32.gmra.mxu0 %v82
    %v1093 = vpop.f32.mrf.mxu0
    %v1094 = vadd.f32 0.0, %v1093
    %v1095 = vpop.f32.mrf.mxu0
    %1096 = vmatprep.mubr.f32.mxu0 0.0
    %1097 = vmatmul.mubr.f32.gmra.mxu0 %v85
    %v1098 = vpop.f32.mrf.mxu0
    %v1099 = vadd.f32 0.0, %v1098
    %v1100 = vpop.f32.mrf.mxu0
    %1101 = vmatprep.mubr.f32.mxu0 0.0
    %1102 = vmatmul.mubr.f32.gmra.mxu0 %v88
    %v1103 = vpop.f32.mrf.mxu0
    %v1104 = vadd.f32 0.0, %v1103
    %v1105 = vpop.f32.mrf.mxu0
    %1106 = vmatprep.mubr.f32.mxu0 0.0
    %1107 = vmatmul.mubr.f32.gmra.mxu0 %v91
    %v1108 = vpop.f32.mrf.mxu0
    %v1109 = vadd.f32 0.0, %v1108
    %v1110 = vpop.f32.mrf.mxu0
    %1111 = vmatprep.mubr.f32.mxu0 0.0
    %1112 = vmatmul.mubr.f32.gmra.mxu0 %v94
    %v1113 = vpop.f32.mrf.mxu0
    %v1114 = vadd.f32 0.0, %v1113
    %v1115 = vpop.f32.mrf.mxu0
    %1116 = vmatprep.mubr.f32.mxu0 0.0
    %1117 = vmatmul.mubr.f32.gmra.mxu0 %v97
    %v1118 = vpop.f32.mrf.mxu0
    %v1119 = vadd.f32 0.0, %v1118
    %v1120 = vpop.f32.mrf.mxu0
    %1121 = vmatprep.mubr.f32.mxu0 0.0
    %1122 = vmatmul.mubr.f32.gmra.mxu0 %v100
    %v1123 = vpop.f32.mrf.mxu0
    %v1124 = vadd.f32 0.0, %v1123
    %v1125 = vpop.f32.mrf.mxu0
    %1126 = vmatprep.mubr.f32.mxu0 0.0
    %1127 = vmatmul.mubr.f32.gmra.mxu0 %v103
    %v1128 = vpop.f32.mrf.mxu0
    %v1129 = vadd.f32 0.0, %v1128
    %v1130 = vpop.f32.mrf.mxu0
    %1131 = vmatprep.mubr.f32.mxu0 0.0
    %1132 = vmatmul.mubr.f32.gmra.mxu0 %v106
    %v1133 = vpop.f32.mrf.mxu0
    %v1134 = vadd.f32 0.0, %v1133
    %v1135 = vpop.f32.mrf.mxu0
    %1136 = vmatprep.mubr.f32.mxu0 0.0
    %1137 = vmatmul.mubr.f32.gmra.mxu0 %v109
    %v1138 = vpop.f32.mrf.mxu0
    %v1139 = vadd.f32 0.0, %v1138
    %v1140 = vpop.f32.mrf.mxu0
    %1141 = vmatprep.mubr.f32.mxu0 0.0
    %1142 = vmatmul.mubr.f32.gmra.mxu0 %v112
    %v1143 = vpop.f32.mrf.mxu0
    %v1144 = vadd.f32 0.0, %v1143
    %v1145 = vpop.f32.mrf.mxu0
    %1146 = vmatprep.mubr.f32.mxu0 0.0
    %1147 = vmatmul.mubr.f32.gmra.mxu0 %v115
    %v1148 = vpop.f32.mrf.mxu0
    %v1149 = vadd.f32 0.0, %v1148
    %v1150 = vpop.f32.mrf.mxu0
    %1151 = vdwg.mxu0
    %v1152 = vsel %vm68, %v1074, 0.0
    %1153 = vadd.xlane.f32.xlu0 %v1152
    %v1154 = vpop.xlane.xlu0 %1153
    %v1155 = vsel %vm68, %v1079, 0.0
    %1156 = vadd.xlane.f32.xlu0 %v1155
    %v1157 = vpop.xlane.xlu0 %1156
    %v1158 = vsel %vm68, %v1084, 0.0
    %1159 = vadd.xlane.f32.xlu0 %v1158
    %v1160 = vpop.xlane.xlu0 %1159
    %v1161 = vsel %vm68, %v1089, 0.0
    %1162 = vadd.xlane.f32.xlu0 %v1161
    %v1163 = vpop.xlane.xlu0 %1162
    %v1164 = vsel %vm68, %v1094, 0.0
    %1165 = vadd.xlane.f32.xlu0 %v1164
    %v1166 = vpop.xlane.xlu0 %1165
    %v1167 = vsel %vm68, %v1099, 0.0
    %1168 = vadd.xlane.f32.xlu0 %v1167
    %v1169 = vpop.xlane.xlu0 %1168
    %v1170 = vsel %vm68, %v1104, 0.0
    %1171 = vadd.xlane.f32.xlu0 %v1170
    %v1172 = vpop.xlane.xlu0 %1171
    %v1173 = vsel %vm68, %v1109, 0.0
    %1174 = vadd.xlane.f32.xlu0 %v1173
    %v1175 = vpop.xlane.xlu0 %1174
    %v1176 = vsel %vm68, %v1114, 0.0
    %1177 = vadd.xlane.f32.xlu0 %v1176
    %v1178 = vpop.xlane.xlu0 %1177
    %v1179 = vsel %vm68, %v1119, 0.0
    %1180 = vadd.xlane.f32.xlu0 %v1179
    %v1181 = vpop.xlane.xlu0 %1180
    %v1182 = vsel %vm68, %v1124, 0.0
    %1183 = vadd.xlane.f32.xlu0 %v1182
    %v1184 = vpop.xlane.xlu0 %1183
    %v1185 = vsel %vm68, %v1129, 0.0
    %1186 = vadd.xlane.f32.xlu0 %v1185
    %v1187 = vpop.xlane.xlu0 %1186
    %v1188 = vsel %vm68, %v1134, 0.0
    %1189 = vadd.xlane.f32.xlu0 %v1188
    %v1190 = vpop.xlane.xlu0 %1189
    %v1191 = vsel %vm68, %v1139, 0.0
    %1192 = vadd.xlane.f32.xlu0 %v1191
    %v1193 = vpop.xlane.xlu0 %1192
    %v1194 = vsel %vm68, %v1144, 0.0
    %1195 = vadd.xlane.f32.xlu0 %v1194
    %v1196 = vpop.xlane.xlu0 %1195
    %v1197 = vsel %vm68, %v1149, 0.0
    %1198 = vadd.xlane.f32.xlu0 %v1197
    %v1199 = vpop.xlane.xlu0 %1198
    %v1200 = vmul.f32 %v1154, %v310
    %v1201 = vmul.f32 %v1157, %v310
    %v1202 = vmul.f32 %v1160, %v310
    %v1203 = vmul.f32 %v1163, %v310
    %v1204 = vmul.f32 %v1166, %v310
    %v1205 = vmul.f32 %v1169, %v310
    %v1206 = vmul.f32 %v1172, %v310
    %v1207 = vmul.f32 %v1175, %v310
    %v1208 = vmul.f32 %v1178, %v310
    %v1209 = vmul.f32 %v1181, %v310
    %v1210 = vmul.f32 %v1184, %v310
    %v1211 = vmul.f32 %v1187, %v310
    %v1212 = vmul.f32 %v1190, %v310
    %v1213 = vmul.f32 %v1193, %v310
    %v1214 = vmul.f32 %v1196, %v310
    %v1215 = vmul.f32 %v1199, %v310
    %v1216 = vsub.f32 %v1074, %v1200
    %v1217 = vsub.f32 %v1079, %v1201
    %v1218 = vsub.f32 %v1084, %v1202
    %v1219 = vsub.f32 %v1089, %v1203
    %v1220 = vsub.f32 %v1094, %v1204
    %v1221 = vsub.f32 %v1099, %v1205
    %v1222 = vsub.f32 %v1104, %v1206
    %v1223 = vsub.f32 %v1109, %v1207
    %v1224 = vsub.f32 %v1114, %v1208
    %v1225 = vsub.f32 %v1119, %v1209
    %v1226 = vsub.f32 %v1124, %v1210
    %v1227 = vsub.f32 %v1129, %v1211
    %v1228 = vsub.f32 %v1134, %v1212
    %v1229 = vsub.f32 %v1139, %v1213
    %v1230 = vsub.f32 %v1144, %v1214
    %v1231 = vsub.f32 %v1149, %v1215
    %v1232 = vmul.f32 %v1216, %v1216
    %v1233 = vmul.f32 %v1217, %v1217
    %v1234 = vmul.f32 %v1218, %v1218
    %v1235 = vmul.f32 %v1219, %v1219
    %v1236 = vmul.f32 %v1220, %v1220
    %v1237 = vmul.f32 %v1221, %v1221
    %v1238 = vmul.f32 %v1222, %v1222
    %v1239 = vmul.f32 %v1223, %v1223
    %v1240 = vmul.f32 %v1224, %v1224
    %v1241 = vmul.f32 %v1225, %v1225
    %v1242 = vmul.f32 %v1226, %v1226
    %v1243 = vmul.f32 %v1227, %v1227
    %v1244 = vmul.f32 %v1228, %v1228
    %v1245 = vmul.f32 %v1229, %v1229
    %v1246 = vmul.f32 %v1230, %v1230
    %v1247 = vmul.f32 %v1231, %v1231
    %v1248 = vsel %vm68, %v1232, 0.0
    %1249 = vadd.xlane.f32.xlu0 %v1248
    %v1250 = vpop.xlane.xlu0 %1249
    %v1251 = vsel %vm68, %v1233, 0.0
    %1252 = vadd.xlane.f32.xlu0 %v1251
    %v1253 = vpop.xlane.xlu0 %1252
    %v1254 = vsel %vm68, %v1234, 0.0
    %1255 = vadd.xlane.f32.xlu0 %v1254
    %v1256 = vpop.xlane.xlu0 %1255
    %v1257 = vsel %vm68, %v1235, 0.0
    %1258 = vadd.xlane.f32.xlu0 %v1257
    %v1259 = vpop.xlane.xlu0 %1258
    %v1260 = vsel %vm68, %v1236, 0.0
    %1261 = vadd.xlane.f32.xlu0 %v1260
    %v1262 = vpop.xlane.xlu0 %1261
    %v1263 = vsel %vm68, %v1237, 0.0
    %1264 = vadd.xlane.f32.xlu0 %v1263
    %v1265 = vpop.xlane.xlu0 %1264
    %v1266 = vsel %vm68, %v1238, 0.0
    %1267 = vadd.xlane.f32.xlu0 %v1266
    %v1268 = vpop.xlane.xlu0 %1267
    %v1269 = vsel %vm68, %v1239, 0.0
    %1270 = vadd.xlane.f32.xlu0 %v1269
    %v1271 = vpop.xlane.xlu0 %1270
    %v1272 = vsel %vm68, %v1240, 0.0
    %1273 = vadd.xlane.f32.xlu0 %v1272
    %v1274 = vpop.xlane.xlu0 %1273
    %v1275 = vsel %vm68, %v1241, 0.0
    %1276 = vadd.xlane.f32.xlu0 %v1275
    %v1277 = vpop.xlane.xlu0 %1276
    %v1278 = vsel %vm68, %v1242, 0.0
    %1279 = vadd.xlane.f32.xlu0 %v1278
    %v1280 = vpop.xlane.xlu0 %1279
    %v1281 = vsel %vm68, %v1243, 0.0
    %1282 = vadd.xlane.f32.xlu0 %v1281
    %v1283 = vpop.xlane.xlu0 %1282
    %v1284 = vsel %vm68, %v1244, 0.0
    %1285 = vadd.xlane.f32.xlu0 %v1284
    %v1286 = vpop.xlane.xlu0 %1285
    %v1287 = vsel %vm68, %v1245, 0.0
    %1288 = vadd.xlane.f32.xlu0 %v1287
    %v1289 = vpop.xlane.xlu0 %1288
    %v1290 = vsel %vm68, %v1246, 0.0
    %1291 = vadd.xlane.f32.xlu0 %v1290
    %v1292 = vpop.xlane.xlu0 %1291
    %v1293 = vsel %vm68, %v1247, 0.0
    %1294 = vadd.xlane.f32.xlu0 %v1293
    %v1295 = vpop.xlane.xlu0 %1294
    %v1296 = vmul.f32 %v1250, %v310
    %v1297 = vmul.f32 %v1253, %v310
    %v1298 = vmul.f32 %v1256, %v310
    %v1299 = vmul.f32 %v1259, %v310
    %v1300 = vmul.f32 %v1262, %v310
    %v1301 = vmul.f32 %v1265, %v310
    %v1302 = vmul.f32 %v1268, %v310
    %v1303 = vmul.f32 %v1271, %v310
    %v1304 = vmul.f32 %v1274, %v310
    %v1305 = vmul.f32 %v1277, %v310
    %v1306 = vmul.f32 %v1280, %v310
    %v1307 = vmul.f32 %v1283, %v310
    %v1308 = vmul.f32 %v1286, %v310
    %v1309 = vmul.f32 %v1289, %v310
    %v1310 = vmul.f32 %v1292, %v310
    %v1311 = vmul.f32 %v1295, %v310
    %v1312 = vadd.f32 %v1296, 1e-05
    %v1313 = vadd.f32 %v1297, 1e-05
    %v1314 = vadd.f32 %v1298, 1e-05
    %v1315 = vadd.f32 %v1299, 1e-05
    %v1316 = vadd.f32 %v1300, 1e-05
    %v1317 = vadd.f32 %v1301, 1e-05
    %v1318 = vadd.f32 %v1302, 1e-05
    %v1319 = vadd.f32 %v1303, 1e-05
    %v1320 = vadd.f32 %v1304, 1e-05
    %v1321 = vadd.f32 %v1305, 1e-05
    %v1322 = vadd.f32 %v1306, 1e-05
    %v1323 = vadd.f32 %v1307, 1e-05
    %v1324 = vadd.f32 %v1308, 1e-05
    %v1325 = vadd.f32 %v1309, 1e-05
    %v1326 = vadd.f32 %v1310, 1e-05
    %v1327 = vadd.f32 %v1311, 1e-05
    %v1328 = vrsqrt.pop %v1312
    %v1329 = vrsqrt.pop %v1313
    %v1330 = vrsqrt.pop %v1314
    %v1331 = vrsqrt.pop %v1315
    %v1332 = vrsqrt.pop %v1316
    %v1333 = vrsqrt.pop %v1317
    %v1334 = vrsqrt.pop %v1318
    %v1335 = vrsqrt.pop %v1319
    %v1336 = vrsqrt.pop %v1320
    %v1337 = vrsqrt.pop %v1321
    %v1338 = vrsqrt.pop %v1322
    %v1339 = vrsqrt.pop %v1323
    %v1340 = vrsqrt.pop %v1324
    %v1341 = vrsqrt.pop %v1325
    %v1342 = vrsqrt.pop %v1326
    %v1343 = vrsqrt.pop %v1327
    %v1344 = vmul.f32 %v1216, %v1328
    %v1345 = vmul.f32 %v1217, %v1329
    %v1346 = vmul.f32 %v1218, %v1330
    %v1347 = vmul.f32 %v1219, %v1331
    %v1348 = vmul.f32 %v1220, %v1332
    %v1349 = vmul.f32 %v1221, %v1333
    %v1350 = vmul.f32 %v1222, %v1334
    %v1351 = vmul.f32 %v1223, %v1335
    %v1352 = vmul.f32 %v1224, %v1336
    %v1353 = vmul.f32 %v1225, %v1337
    %v1354 = vmul.f32 %v1226, %v1338
    %v1355 = vmul.f32 %v1227, %v1339
    %v1356 = vmul.f32 %v1228, %v1340
    %v1357 = vmul.f32 %v1229, %v1341
    %v1358 = vmul.f32 %v1230, %v1342
    %v1359 = vmul.f32 %v1231, %v1343
    %v1360 = vmul.f32 %v1344, %v475
    %v1361 = vmul.f32 %v1345, %v475
    %v1362 = vmul.f32 %v1346, %v475
    %v1363 = vmul.f32 %v1347, %v475
    %v1364 = vmul.f32 %v1348, %v475
    %v1365 = vmul.f32 %v1349, %v475
    %v1366 = vmul.f32 %v1350, %v475
    %v1367 = vmul.f32 %v1351, %v475
    %v1368 = vmul.f32 %v1352, %v475
    %v1369 = vmul.f32 %v1353, %v475
    %v1370 = vmul.f32 %v1354, %v475
    %v1371 = vmul.f32 %v1355, %v475
    %v1372 = vmul.f32 %v1356, %v475
    %v1373 = vmul.f32 %v1357, %v475
    %v1374 = vmul.f32 %v1358, %v475
    %v1375 = vmul.f32 %v1359, %v475
    %v1376 = vadd.f32 %v1360, %v497
    %v1377 = vadd.f32 %v1361, %v497
    %v1378 = vadd.f32 %v1362, %v497
    %v1379 = vadd.f32 %v1363, %v497
    %v1380 = vadd.f32 %v1364, %v497
    %v1381 = vadd.f32 %v1365, %v497
    %v1382 = vadd.f32 %v1366, %v497
    %v1383 = vadd.f32 %v1367, %v497
    %v1384 = vadd.f32 %v1368, %v497
    %v1385 = vadd.f32 %v1369, %v497
    %v1386 = vadd.f32 %v1370, %v497
    %v1387 = vadd.f32 %v1371, %v497
    %v1388 = vadd.f32 %v1372, %v497
    %v1389 = vadd.f32 %v1373, %v497
    %v1390 = vadd.f32 %v1374, %v497
    %v1391 = vadd.f32 %v1375, %v497
    %s1392 = scalar_lea.vmem [#allocation5], 96
    %v1393 = vld [vmem:[%s1392] sm:$0xff]
    %v1394 = vld [vmem:[%s1392 + $0x8] sm:$0xff]
    %v1395 = vld [vmem:[%s1392 + $0x10] sm:$0xff]
    %v1396 = vld [vmem:[%s1392 + $0x18] sm:$0xff]
    %1397 = vmatprep.subr.mxu0 0.0
    %1398 = vmatpush1.msra.mxu0 0.0
    %1399 = vmatprep.subr.mxu0 0.0
    %1400 = vmatpush1.msra.mxu0 0.0
    %1401 = vmatprep.subr.mxu0 0.0
    %1402 = vmatpush1.msra.mxu0 0.0
    %1403 = vmatprep.subr.mxu0 0.0
    %1404 = vmatpush1.msra.mxu0 0.0
    %1405 = vmatprep.subr.mxu0 0.0
    %1406 = vmatpush1.msra.mxu0 0.0
    %1407 = vmatprep.subr.mxu0 0.0
    %1408 = vmatpush1.msra.mxu0 0.0
    %1409 = vmatprep.subr.mxu0 0.0
    %1410 = vmatpush1.msra.mxu0 0.0
    %1411 = vmatprep.subr.mxu0 0.0
    %1412 = vmatpush1.msra.mxu0 0.0
    %1413 = vmatprep.subr.mxu0 0.0
    %1414 = vmatpush1.msra.mxu0 0.0
    %1415 = vmatprep.subr.mxu0 0.0
    %1416 = vmatpush1.msra.mxu0 0.0
    %1417 = vmatprep.subr.mxu0 0.0
    %1418 = vmatpush1.msra.mxu0 0.0
    %1419 = vmatprep.subr.mxu0 0.0
    %1420 = vmatpush1.msra.mxu0 0.0
    %1421 = vmatprep.subr.mxu0 0.0
    %1422 = vmatpush1.msra.mxu0 %v1396
    %1423 = vmatprep.subr.mxu0 0.0
    %1424 = vmatpush1.msra.mxu0 %v1395
    %1425 = vmatprep.subr.mxu0 0.0
    %1426 = vmatpush1.msra.mxu0 %v1394
    %1427 = vmatprep.subr.mxu0 0.0
    %1428 = vmatpush1.msra.mxu0 %v1393
    %1429 = vmatprep.subr.mxu0 0.0
    %1430 = vmatpush2.msra.mxu0 0.0
    %1431 = vmatprep.subr.mxu0 0.0
    %1432 = vmatpush2.msra.mxu0 0.0
    %1433 = vmatprep.subr.mxu0 0.0
    %1434 = vmatpush2.msra.mxu0 0.0
    %1435 = vmatprep.subr.mxu0 0.0
    %1436 = vmatpush2.msra.mxu0 0.0
    %1437 = vmatprep.subr.mxu0 0.0
    %1438 = vmatpush2.msra.mxu0 0.0
    %1439 = vmatprep.subr.mxu0 0.0
    %1440 = vmatpush2.msra.mxu0 0.0
    %1441 = vmatprep.subr.mxu0 0.0
    %1442 = vmatpush2.msra.mxu0 0.0
    %1443 = vmatprep.subr.mxu0 0.0
    %1444 = vmatpush2.msra.mxu0 0.0
    %1445 = vmatprep.subr.mxu0 0.0
    %1446 = vmatpush2.msra.mxu0 0.0
    %1447 = vmatprep.subr.mxu0 0.0
    %1448 = vmatpush2.msra.mxu0 0.0
    %1449 = vmatprep.subr.mxu0 0.0
    %1450 = vmatpush2.msra.mxu0 0.0
    %1451 = vmatprep.subr.mxu0 0.0
    %1452 = vmatpush2.msra.mxu0 0.0
    %1453 = vmatprep.subr.mxu0 0.0
    %1454 = vmatpush2.msra.mxu0 0.0
    %1455 = vmatprep.subr.mxu0 0.0
    %1456 = vmatpush2.msra.mxu0 0.0
    %1457 = vmatprep.subr.mxu0 0.0
    %1458 = vmatpush2.msra.mxu0 0.0
    %1459 = vmatprep.subr.mxu0 0.0
    %1460 = vmatpush2.msra.mxu0 0.0
    %1461 = vmatprep.mubr.f32.mxu0 0.0
    %1462 = vmatmul.mubr.f32.gmra.mxu0 %v70
    %v1463 = vpop.f32.mrf.mxu0
    %v1464 = vadd.f32 0.0, %v1463
    %v1465 = vpop.f32.mrf.mxu0
    %1466 = vmatprep.mubr.f32.mxu0 0.0
    %1467 = vmatmul.mubr.f32.gmra.mxu0 %v73
    %v1468 = vpop.f32.mrf.mxu0
    %v1469 = vadd.f32 0.0, %v1468
    %v1470 = vpop.f32.mrf.mxu0
    %1471 = vmatprep.mubr.f32.mxu0 0.0
    %1472 = vmatmul.mubr.f32.gmra.mxu0 %v76
    %v1473 = vpop.f32.mrf.mxu0
    %v1474 = vadd.f32 0.0, %v1473
    %v1475 = vpop.f32.mrf.mxu0
    %1476 = vmatprep.mubr.f32.mxu0 0.0
    %1477 = vmatmul.mubr.f32.gmra.mxu0 %v79
    %v1478 = vpop.f32.mrf.mxu0
    %v1479 = vadd.f32 0.0, %v1478
    %v1480 = vpop.f32.mrf.mxu0
    %1481 = vmatprep.mubr.f32.mxu0 0.0
    %1482 = vmatmul.mubr.f32.gmra.mxu0 %v82
    %v1483 = vpop.f32.mrf.mxu0
    %v1484 = vadd.f32 0.0, %v1483
    %v1485 = vpop.f32.mrf.mxu0
    %1486 = vmatprep.mubr.f32.mxu0 0.0
    %1487 = vmatmul.mubr.f32.gmra.mxu0 %v85
    %v1488 = vpop.f32.mrf.mxu0
    %v1489 = vadd.f32 0.0, %v1488
    %v1490 = vpop.f32.mrf.mxu0
    %1491 = vmatprep.mubr.f32.mxu0 0.0
    %1492 = vmatmul.mubr.f32.gmra.mxu0 %v88
    %v1493 = vpop.f32.mrf.mxu0
    %v1494 = vadd.f32 0.0, %v1493
    %v1495 = vpop.f32.mrf.mxu0
    %1496 = vmatprep.mubr.f32.mxu0 0.0
    %1497 = vmatmul.mubr.f32.gmra.mxu0 %v91
    %v1498 = vpop.f32.mrf.mxu0
    %v1499 = vadd.f32 0.0, %v1498
    %v1500 = vpop.f32.mrf.mxu0
    %1501 = vmatprep.mubr.f32.mxu0 0.0
    %1502 = vmatmul.mubr.f32.gmra.mxu0 %v94
    %v1503 = vpop.f32.mrf.mxu0
    %v1504 = vadd.f32 0.0, %v1503
    %v1505 = vpop.f32.mrf.mxu0
    %1506 = vmatprep.mubr.f32.mxu0 0.0
    %1507 = vmatmul.mubr.f32.gmra.mxu0 %v97
    %v1508 = vpop.f32.mrf.mxu0
    %v1509 = vadd.f32 0.0, %v1508
    %v1510 = vpop.f32.mrf.mxu0
    %1511 = vmatprep.mubr.f32.mxu0 0.0
    %1512 = vmatmul.mubr.f32.gmra.mxu0 %v100
    %v1513 = vpop.f32.mrf.mxu0
    %v1514 = vadd.f32 0.0, %v1513
    %v1515 = vpop.f32.mrf.mxu0
    %1516 = vmatprep.mubr.f32.mxu0 0.0
    %1517 = vmatmul.mubr.f32.gmra.mxu0 %v103
    %v1518 = vpop.f32.mrf.mxu0
    %v1519 = vadd.f32 0.0, %v1518
    %v1520 = vpop.f32.mrf.mxu0
    %1521 = vmatprep.mubr.f32.mxu0 0.0
    %1522 = vmatmul.mubr.f32.gmra.mxu0 %v106
    %v1523 = vpop.f32.mrf.mxu0
    %v1524 = vadd.f32 0.0, %v1523
    %v1525 = vpop.f32.mrf.mxu0
    %1526 = vmatprep.mubr.f32.mxu0 0.0
    %1527 = vmatmul.mubr.f32.gmra.mxu0 %v109
    %v1528 = vpop.f32.mrf.mxu0
    %v1529 = vadd.f32 0.0, %v1528
    %v1530 = vpop.f32.mrf.mxu0
    %1531 = vmatprep.mubr.f32.mxu0 0.0
    %1532 = vmatmul.mubr.f32.gmra.mxu0 %v112
    %v1533 = vpop.f32.mrf.mxu0
    %v1534 = vadd.f32 0.0, %v1533
    %v1535 = vpop.f32.mrf.mxu0
    %1536 = vmatprep.mubr.f32.mxu0 0.0
    %1537 = vmatmul.mubr.f32.gmra.mxu0 %v115
    %v1538 = vpop.f32.mrf.mxu0
    %v1539 = vadd.f32 0.0, %v1538
    %v1540 = vpop.f32.mrf.mxu0
    %1541 = vdwg.mxu0
    %v1542 = vsel %vm68, %v1464, 0.0
    %1543 = vadd.xlane.f32.xlu0 %v1542
    %v1544 = vpop.xlane.xlu0 %1543
    %v1545 = vsel %vm68, %v1469, 0.0
    %1546 = vadd.xlane.f32.xlu0 %v1545
    %v1547 = vpop.xlane.xlu0 %1546
    %v1548 = vsel %vm68, %v1474, 0.0
    %1549 = vadd.xlane.f32.xlu0 %v1548
    %v1550 = vpop.xlane.xlu0 %1549
    %v1551 = vsel %vm68, %v1479, 0.0
    %1552 = vadd.xlane.f32.xlu0 %v1551
    %v1553 = vpop.xlane.xlu0 %1552
    %v1554 = vsel %vm68, %v1484, 0.0
    %1555 = vadd.xlane.f32.xlu0 %v1554
    %v1556 = vpop.xlane.xlu0 %1555
    %v1557 = vsel %vm68, %v1489, 0.0
    %1558 = vadd.xlane.f32.xlu0 %v1557
    %v1559 = vpop.xlane.xlu0 %1558
    %v1560 = vsel %vm68, %v1494, 0.0
    %1561 = vadd.xlane.f32.xlu0 %v1560
    %v1562 = vpop.xlane.xlu0 %1561
    %v1563 = vsel %vm68, %v1499, 0.0
    %1564 = vadd.xlane.f32.xlu0 %v1563
    %v1565 = vpop.xlane.xlu0 %1564
    %v1566 = vsel %vm68, %v1504, 0.0
    %1567 = vadd.xlane.f32.xlu0 %v1566
    %v1568 = vpop.xlane.xlu0 %1567
    %v1569 = vsel %vm68, %v1509, 0.0
    %1570 = vadd.xlane.f32.xlu0 %v1569
    %v1571 = vpop.xlane.xlu0 %1570
    %v1572 = vsel %vm68, %v1514, 0.0
    %1573 = vadd.xlane.f32.xlu0 %v1572
    %v1574 = vpop.xlane.xlu0 %1573
    %v1575 = vsel %vm68, %v1519, 0.0
    %1576 = vadd.xlane.f32.xlu0 %v1575
    %v1577 = vpop.xlane.xlu0 %1576
    %v1578 = vsel %vm68, %v1524, 0.0
    %1579 = vadd.xlane.f32.xlu0 %v1578
    %v1580 = vpop.xlane.xlu0 %1579
    %v1581 = vsel %vm68, %v1529, 0.0
    %1582 = vadd.xlane.f32.xlu0 %v1581
    %v1583 = vpop.xlane.xlu0 %1582
    %v1584 = vsel %vm68, %v1534, 0.0
    %1585 = vadd.xlane.f32.xlu0 %v1584
    %v1586 = vpop.xlane.xlu0 %1585
    %v1587 = vsel %vm68, %v1539, 0.0
    %1588 = vadd.xlane.f32.xlu0 %v1587
    %v1589 = vpop.xlane.xlu0 %1588
    %v1590 = vmul.f32 %v1544, %v310
    %v1591 = vmul.f32 %v1547, %v310
    %v1592 = vmul.f32 %v1550, %v310
    %v1593 = vmul.f32 %v1553, %v310
    %v1594 = vmul.f32 %v1556, %v310
    %v1595 = vmul.f32 %v1559, %v310
    %v1596 = vmul.f32 %v1562, %v310
    %v1597 = vmul.f32 %v1565, %v310
    %v1598 = vmul.f32 %v1568, %v310
    %v1599 = vmul.f32 %v1571, %v310
    %v1600 = vmul.f32 %v1574, %v310
    %v1601 = vmul.f32 %v1577, %v310
    %v1602 = vmul.f32 %v1580, %v310
    %v1603 = vmul.f32 %v1583, %v310
    %v1604 = vmul.f32 %v1586, %v310
    %v1605 = vmul.f32 %v1589, %v310
    %v1606 = vsub.f32 %v1464, %v1590
    %v1607 = vsub.f32 %v1469, %v1591
    %v1608 = vsub.f32 %v1474, %v1592
    %v1609 = vsub.f32 %v1479, %v1593
    %v1610 = vsub.f32 %v1484, %v1594
    %v1611 = vsub.f32 %v1489, %v1595
    %v1612 = vsub.f32 %v1494, %v1596
    %v1613 = vsub.f32 %v1499, %v1597
    %v1614 = vsub.f32 %v1504, %v1598
    %v1615 = vsub.f32 %v1509, %v1599
    %v1616 = vsub.f32 %v1514, %v1600
    %v1617 = vsub.f32 %v1519, %v1601
    %v1618 = vsub.f32 %v1524, %v1602
    %v1619 = vsub.f32 %v1529, %v1603
    %v1620 = vsub.f32 %v1534, %v1604
    %v1621 = vsub.f32 %v1539, %v1605
    %v1622 = vmul.f32 %v1606, %v1606
    %v1623 = vmul.f32 %v1607, %v1607
    %v1624 = vmul.f32 %v1608, %v1608
    %v1625 = vmul.f32 %v1609, %v1609
    %v1626 = vmul.f32 %v1610, %v1610
    %v1627 = vmul.f32 %v1611, %v1611
    %v1628 = vmul.f32 %v1612, %v1612
    %v1629 = vmul.f32 %v1613, %v1613
    %v1630 = vmul.f32 %v1614, %v1614
    %v1631 = vmul.f32 %v1615, %v1615
    %v1632 = vmul.f32 %v1616, %v1616
    %v1633 = vmul.f32 %v1617, %v1617
    %v1634 = vmul.f32 %v1618, %v1618
    %v1635 = vmul.f32 %v1619, %v1619
    %v1636 = vmul.f32 %v1620, %v1620
    %v1637 = vmul.f32 %v1621, %v1621
    %v1638 = vsel %vm68, %v1622, 0.0
    %1639 = vadd.xlane.f32.xlu0 %v1638
    %v1640 = vpop.xlane.xlu0 %1639
    %v1641 = vsel %vm68, %v1623, 0.0
    %1642 = vadd.xlane.f32.xlu0 %v1641
    %v1643 = vpop.xlane.xlu0 %1642
    %v1644 = vsel %vm68, %v1624, 0.0
    %1645 = vadd.xlane.f32.xlu0 %v1644
    %v1646 = vpop.xlane.xlu0 %1645
    %v1647 = vsel %vm68, %v1625, 0.0
    %1648 = vadd.xlane.f32.xlu0 %v1647
    %v1649 = vpop.xlane.xlu0 %1648
    %v1650 = vsel %vm68, %v1626, 0.0
    %1651 = vadd.xlane.f32.xlu0 %v1650
    %v1652 = vpop.xlane.xlu0 %1651
    %v1653 = vsel %vm68, %v1627, 0.0
    %1654 = vadd.xlane.f32.xlu0 %v1653
    %v1655 = vpop.xlane.xlu0 %1654
    %v1656 = vsel %vm68, %v1628, 0.0
    %1657 = vadd.xlane.f32.xlu0 %v1656
    %v1658 = vpop.xlane.xlu0 %1657
    %v1659 = vsel %vm68, %v1629, 0.0
    %1660 = vadd.xlane.f32.xlu0 %v1659
    %v1661 = vpop.xlane.xlu0 %1660
    %v1662 = vsel %vm68, %v1630, 0.0
    %1663 = vadd.xlane.f32.xlu0 %v1662
    %v1664 = vpop.xlane.xlu0 %1663
    %v1665 = vsel %vm68, %v1631, 0.0
    %1666 = vadd.xlane.f32.xlu0 %v1665
    %v1667 = vpop.xlane.xlu0 %1666
    %v1668 = vsel %vm68, %v1632, 0.0
    %1669 = vadd.xlane.f32.xlu0 %v1668
    %v1670 = vpop.xlane.xlu0 %1669
    %v1671 = vsel %vm68, %v1633, 0.0
    %1672 = vadd.xlane.f32.xlu0 %v1671
    %v1673 = vpop.xlane.xlu0 %1672
    %v1674 = vsel %vm68, %v1634, 0.0
    %1675 = vadd.xlane.f32.xlu0 %v1674
    %v1676 = vpop.xlane.xlu0 %1675
    %v1677 = vsel %vm68, %v1635, 0.0
    %1678 = vadd.xlane.f32.xlu0 %v1677
    %v1679 = vpop.xlane.xlu0 %1678
    %v1680 = vsel %vm68, %v1636, 0.0
    %1681 = vadd.xlane.f32.xlu0 %v1680
    %v1682 = vpop.xlane.xlu0 %1681
    %v1683 = vsel %vm68, %v1637, 0.0
    %1684 = vadd.xlane.f32.xlu0 %v1683
    %v1685 = vpop.xlane.xlu0 %1684
    %v1686 = vmul.f32 %v1640, %v310
    %v1687 = vmul.f32 %v1643, %v310
    %v1688 = vmul.f32 %v1646, %v310
    %v1689 = vmul.f32 %v1649, %v310
    %v1690 = vmul.f32 %v1652, %v310
    %v1691 = vmul.f32 %v1655, %v310
    %v1692 = vmul.f32 %v1658, %v310
    %v1693 = vmul.f32 %v1661, %v310
    %v1694 = vmul.f32 %v1664, %v310
    %v1695 = vmul.f32 %v1667, %v310
    %v1696 = vmul.f32 %v1670, %v310
    %v1697 = vmul.f32 %v1673, %v310
    %v1698 = vmul.f32 %v1676, %v310
    %v1699 = vmul.f32 %v1679, %v310
    %v1700 = vmul.f32 %v1682, %v310
    %v1701 = vmul.f32 %v1685, %v310
    %v1702 = vadd.f32 %v1686, 1e-05
    %v1703 = vadd.f32 %v1687, 1e-05
    %v1704 = vadd.f32 %v1688, 1e-05
    %v1705 = vadd.f32 %v1689, 1e-05
    %v1706 = vadd.f32 %v1690, 1e-05
    %v1707 = vadd.f32 %v1691, 1e-05
    %v1708 = vadd.f32 %v1692, 1e-05
    %v1709 = vadd.f32 %v1693, 1e-05
    %v1710 = vadd.f32 %v1694, 1e-05
    %v1711 = vadd.f32 %v1695, 1e-05
    %v1712 = vadd.f32 %v1696, 1e-05
    %v1713 = vadd.f32 %v1697, 1e-05
    %v1714 = vadd.f32 %v1698, 1e-05
    %v1715 = vadd.f32 %v1699, 1e-05
    %v1716 = vadd.f32 %v1700, 1e-05
    %v1717 = vadd.f32 %v1701, 1e-05
    %v1718 = vrsqrt.pop %v1702
    %v1719 = vrsqrt.pop %v1703
    %v1720 = vrsqrt.pop %v1704
    %v1721 = vrsqrt.pop %v1705
    %v1722 = vrsqrt.pop %v1706
    %v1723 = vrsqrt.pop %v1707
    %v1724 = vrsqrt.pop %v1708
    %v1725 = vrsqrt.pop %v1709
    %v1726 = vrsqrt.pop %v1710
    %v1727 = vrsqrt.pop %v1711
    %v1728 = vrsqrt.pop %v1712
    %v1729 = vrsqrt.pop %v1713
    %v1730 = vrsqrt.pop %v1714
    %v1731 = vrsqrt.pop %v1715
    %v1732 = vrsqrt.pop %v1716
    %v1733 = vrsqrt.pop %v1717
    %v1734 = vmul.f32 %v1606, %v1718
    %v1735 = vmul.f32 %v1607, %v1719
    %v1736 = vmul.f32 %v1608, %v1720
    %v1737 = vmul.f32 %v1609, %v1721
    %v1738 = vmul.f32 %v1610, %v1722
    %v1739 = vmul.f32 %v1611, %v1723
    %v1740 = vmul.f32 %v1612, %v1724
    %v1741 = vmul.f32 %v1613, %v1725
    %v1742 = vmul.f32 %v1614, %v1726
    %v1743 = vmul.f32 %v1615, %v1727
    %v1744 = vmul.f32 %v1616, %v1728
    %v1745 = vmul.f32 %v1617, %v1729
    %v1746 = vmul.f32 %v1618, %v1730
    %v1747 = vmul.f32 %v1619, %v1731
    %v1748 = vmul.f32 %v1620, %v1732
    %v1749 = vmul.f32 %v1621, %v1733
    %v1750 = vmul.f32 %v1734, %v475
    %v1751 = vmul.f32 %v1735, %v475
    %v1752 = vmul.f32 %v1736, %v475
    %v1753 = vmul.f32 %v1737, %v475
    %v1754 = vmul.f32 %v1738, %v475
    %v1755 = vmul.f32 %v1739, %v475
    %v1756 = vmul.f32 %v1740, %v475
    %v1757 = vmul.f32 %v1741, %v475
    %v1758 = vmul.f32 %v1742, %v475
    %v1759 = vmul.f32 %v1743, %v475
    %v1760 = vmul.f32 %v1744, %v475
    %v1761 = vmul.f32 %v1745, %v475
    %v1762 = vmul.f32 %v1746, %v475
    %v1763 = vmul.f32 %v1747, %v475
    %v1764 = vmul.f32 %v1748, %v475
    %v1765 = vmul.f32 %v1749, %v475
    %v1766 = vadd.f32 %v1750, %v497
    %v1767 = vadd.f32 %v1751, %v497
    %v1768 = vadd.f32 %v1752, %v497
    %v1769 = vadd.f32 %v1753, %v497
    %v1770 = vadd.f32 %v1754, %v497
    %v1771 = vadd.f32 %v1755, %v497
    %v1772 = vadd.f32 %v1756, %v497
    %v1773 = vadd.f32 %v1757, %v497
    %v1774 = vadd.f32 %v1758, %v497
    %v1775 = vadd.f32 %v1759, %v497
    %v1776 = vadd.f32 %v1760, %v497
    %v1777 = vadd.f32 %v1761, %v497
    %v1778 = vadd.f32 %v1762, %v497
    %v1779 = vadd.f32 %v1763, %v497
    %v1780 = vadd.f32 %v1764, %v497
    %v1781 = vadd.f32 %v1765, %v497
    %1798 = vrot.lane.b32.xlu0 %v1766, 32
    %v1799 = vpop.permute.xlu0 %1798
    %1800 = vrot.lane.b32.xlu0 %v1767, 32
    %v1801 = vpop.permute.xlu0 %1800
    %1802 = vrot.lane.b32.xlu0 %v1768, 32
    %v1803 = vpop.permute.xlu0 %1802
    %1804 = vrot.lane.b32.xlu0 %v1769, 32
    %v1805 = vpop.permute.xlu0 %1804
    %1806 = vrot.lane.b32.xlu0 %v1770, 32
    %v1807 = vpop.permute.xlu0 %1806
    %1808 = vrot.lane.b32.xlu0 %v1771, 32
    %v1809 = vpop.permute.xlu0 %1808
    %1810 = vrot.lane.b32.xlu0 %v1772, 32
    %v1811 = vpop.permute.xlu0 %1810
    %1812 = vrot.lane.b32.xlu0 %v1773, 32
    %v1813 = vpop.permute.xlu0 %1812
    %1814 = vrot.lane.b32.xlu0 %v1774, 32
    %v1815 = vpop.permute.xlu0 %1814
    %1816 = vrot.lane.b32.xlu0 %v1775, 32
    %v1817 = vpop.permute.xlu0 %1816
    %1818 = vrot.lane.b32.xlu0 %v1776, 32
    %v1819 = vpop.permute.xlu0 %1818
    %1820 = vrot.lane.b32.xlu0 %v1777, 32
    %v1821 = vpop.permute.xlu0 %1820
    %1822 = vrot.lane.b32.xlu0 %v1778, 32
    %v1823 = vpop.permute.xlu0 %1822
    %1824 = vrot.lane.b32.xlu0 %v1779, 32
    %v1825 = vpop.permute.xlu0 %1824
    %1826 = vrot.lane.b32.xlu0 %v1780, 32
    %v1827 = vpop.permute.xlu0 %1826
    %1828 = vrot.lane.b32.xlu0 %v1781, 32
    %v1829 = vpop.permute.xlu0 %1828
    %v1846 = vsel %vm68, %v1376, %v1799
    %v1847 = vsel %vm68, %v1377, %v1801
    %v1848 = vsel %vm68, %v1378, %v1803
    %v1849 = vsel %vm68, %v1379, %v1805
    %v1850 = vsel %vm68, %v1380, %v1807
    %v1851 = vsel %vm68, %v1381, %v1809
    %v1852 = vsel %vm68, %v1382, %v1811
    %v1853 = vsel %vm68, %v1383, %v1813
    %v1854 = vsel %vm68, %v1384, %v1815
    %v1855 = vsel %vm68, %v1385, %v1817
    %v1856 = vsel %vm68, %v1386, %v1819
    %v1857 = vsel %vm68, %v1387, %v1821
    %v1858 = vsel %vm68, %v1388, %v1823
    %v1859 = vsel %vm68, %v1389, %v1825
    %v1860 = vsel %vm68, %v1390, %v1827
    %v1861 = vsel %vm68, %v1391, %v1829
    %s1862 = scalar_lea.vmem [#allocation7], 8
    %1863 = vst.msk [vmem:[%s1862] sm:$0xff] %vm985, %v1846
    %1864 = vst.msk [vmem:[%s1862 + $0x10] sm:$0xff] %vm985, %v1847
    %1865 = vst.msk [vmem:[%s1862 + $0x20] sm:$0xff] %vm985, %v1848
    %1866 = vst.msk [vmem:[%s1862 + $0x30] sm:$0xff] %vm985, %v1849
    %1867 = vst.msk [vmem:[%s1862 + $0x40] sm:$0xff] %vm985, %v1850
    %1868 = vst.msk [vmem:[%s1862 + $0x50] sm:$0xff] %vm985, %v1851
    %1869 = vst.msk [vmem:[%s1862 + $0x60] sm:$0xff] %vm985, %v1852
    %1870 = vst.msk [vmem:[%s1862 + $0x70] sm:$0xff] %vm985, %v1853
    %1871 = vst.msk [vmem:[%s1862 + $0x80] sm:$0xff] %vm985, %v1854
    %1872 = vst.msk [vmem:[%s1862 + $0x90] sm:$0xff] %vm985, %v1855
    %1873 = vst.msk [vmem:[%s1862 + $0xa0] sm:$0xff] %vm985, %v1856
    %1874 = vst.msk [vmem:[%s1862 + $0xb0] sm:$0xff] %vm985, %v1857
    %1875 = vst.msk [vmem:[%s1862 + $0xc0] sm:$0xff] %vm985, %v1858
    %1876 = vst.msk [vmem:[%s1862 + $0xd0] sm:$0xff] %vm985, %v1859
    %1877 = vst.msk [vmem:[%s1862 + $0xe0] sm:$0xff] %vm985, %v1860
    %1878 = vst.msk [vmem:[%s1862 + $0xf0] sm:$0xff] %vm985, %v1861
    // Predicated region
    $region26: #{tpu_custom_call.1} parent=1 // pred_check
      _
    $region27: #{tpu_custom_call.1} parent=1 // pred_check_branch
      %1880 = sbr.rel (0) target = $region29
    $region28: #{tpu_custom_call.1} parent=1 // pred_region
      %s1882 = ssub.s32 4096, 4096
      %1883 = vsyncadd [#allocation4], %s1882
      %s1884 = sshll.u32 [#allocation7], 4
      %s1885 = int_to_ptr.vmem [resolvable:$true] %s1884
      %1890 = dma.vmem_to_hbm [thread:$0]  %s1885, 4096, %s4, [#allocation4], 128, 128, 8
    $region29: #{tpu_custom_call.1} parent=1 // pred_fallthru
      _
    // Predicated region
    $region30: #{tpu_custom_call.1} parent=1 // pred_check
      _
    $region31: #{tpu_custom_call.1} parent=1 // pred_check_branch
      %1892 = sbr.rel (0) target = $region33
    $region32: #{tpu_custom_call.1} parent=1 // pred_region
      %1893 = dma.done [#allocation4], 4096
    $region33: #{tpu_custom_call.1} parent=1 // pred_fallthru
      _
    %1894 = vsyncpa [#allocation3], 1
    %1895 = vsyncpa [#allocation6], 1
    %1896 = vsyncpa [#allocation4], 1

</llo_original>
